<compile_context>
chip_gen: v5e
topology: v5e:2x2
jax: 0.10.0
libtpu: 0.0.40
codegen_flags: <defaults>
</compile_context>

<pallas_src>
import functools

import jax
import jax.numpy as jnp
from jax import lax
from jax.experimental import pallas as pl
from jax.experimental.pallas import tpu as pltpu


def rnn_model_kernel(x_ref, h0_ref, c0_ref,
                     g1_ref, b1_ref,
                     wih0_ref, whh0_ref, bg0_ref,
                     wih1_ref, whh1_ref, bg1_ref,
                     g2_ref, b2_ref,
                     wout_ref, bout_ref,
                     y_ref, hN_ref, cN_ref,
                     gi_scr, h1_scr,
                     *, fuse_recurrent, unroll):
    """Whole forward pass; runs once (grid=()) with everything VMEM-resident.

    x_ref:   (T, B, D)    input, time-major
    h0/c0:   (2, B, H)    initial LSTM state (layer 0, layer 1)
    g1/b1:   (1, D)       BatchNorm1d(dim) gamma / beta
    wih0:    (D, 4H)      layer-0 input weights, gates (i,f,o,g) along lanes
    whh0:    (H, 4H)      layer-0 hidden weights
    bg0:     (1, 4H)      layer-0 bias (b_ih + b_hh)
    wih1/whh1/bg1:        layer-1 analogues (input dim = H)
    g2/b2:   (1, H)       BatchNorm1d(hidden) gamma / beta
    wout:    (H, D)       Linear weight transposed; bout: (1, D)
    y_ref:   (T, B, D)    output
    hN/cN:   (2, B, H)    final LSTM state
    gi_scr:  (T, B, 4H)   VMEM scratch f32 (precomputed layer-0 input gates)
    h1_scr:  (T, B, H)    VMEM scratch (layer-1 hidden states, MXU dtype)
    fuse_recurrent: static; fuse the two recurrent dots into one 256-wide dot
    unroll:  static int, fori_loop unroll factor
    """
    T, B, D = x_ref.shape
    H = h0_ref.shape[-1]
    eps = 1e-5
    cdt = wih0_ref.dtype        # MXU operand dtype (bf16), f32 accumulation
    f32 = jnp.float32
    n = float(T * B)            # BN sample count (per-feature over B*T)

    # ---- BN1: train-mode batch stats, centered two-pass (no cancellation) ----
    x2d = x_ref[...].reshape(T * B, D)
    mean1 = jnp.sum(x2d, axis=0, keepdims=True) / n
    xc = x2d - mean1
    var1 = jnp.sum(xc * xc, axis=0, keepdims=True) / n
    scale1 = g1_ref[...] * lax.rsqrt(var1 + eps)             # (1, D)
    xn2d = xc * scale1 + b1_ref[...]                          # normalized input

    # ---- layer-0 input projection hoisted out of the recurrence (one GEMM) --
    gi_scr[...] = (jnp.dot(xn2d.astype(cdt), wih0_ref[...],
                           preferred_element_type=f32)
                   + bg0_ref[...]).reshape(T, B, 4 * H)

    # Hoist weight loads out of the serial loop.
    whh0 = whh0_ref[...]
    wih1 = wih1_ref[...]
    whh1 = whh1_ref[...]
    bg1 = bg1_ref[...]

    if fuse_recurrent:
        # Block-diagonal (2H, 8H) recurrent weight: one 256-wide MXU push per
        # step covers both layers' h-recurrent contributions (v6e / v7x).
        z = jnp.zeros((H, 4 * H), cdt)
        whh_f = jnp.concatenate(
            [jnp.concatenate([whh0, z], axis=1),
             jnp.concatenate([z, whh1], axis=1)], axis=0)     # (2H, 8H)

    def gates_to_hc(g, c):
        # Lane layout [ i | f | o | g ]: one sigmoid over the contiguous
        # (B, 3H) slab + one tanh over (B, H) => 2 EUP pushes per layer-step.
        sg = jax.nn.sigmoid(g[:, :3 * H])
        tg = jnp.tanh(g[:, 3 * H:])
        c_new = sg[:, H:2 * H] * c + sg[:, :H] * tg
        h_new = sg[:, 2 * H:3 * H] * jnp.tanh(c_new)
        return h_new, c_new

    def step(t, carry):
        h_l0, c_l0, h_l1, c_l1, sum_h, sum_h2 = carry
        if fuse_recurrent:
            hcat = jnp.concatenate([h_l0, h_l1], axis=-1).astype(cdt)  # (B,2H)
            rec = jnp.dot(hcat, whh_f, preferred_element_type=f32)     # (B,8H)
            g0 = gi_scr[t] + rec[:, :4 * H]
            h_l0, c_l0 = gates_to_hc(g0, c_l0)
            g1 = (jnp.dot(h_l0.astype(cdt), wih1, preferred_element_type=f32)
                  + rec[:, 4 * H:] + bg1)
        else:
            # v5e path: two 128-wide recurrent dots (4H = 128 fills one push).
            g0 = gi_scr[t] + jnp.dot(h_l0.astype(cdt), whh0,
                                     preferred_element_type=f32)
            h_l0, c_l0 = gates_to_hc(g0, c_l0)
            g1 = (jnp.dot(h_l0.astype(cdt), wih1, preferred_element_type=f32)
                  + jnp.dot(h_l1.astype(cdt), whh1, preferred_element_type=f32)
                  + bg1)
        h_l1, c_l1 = gates_to_hc(g1, c_l1)
        h1_scr[t] = h_l1.astype(h1_scr.dtype)     # bf16 history for output GEMM
        # Incremental BN2 statistics in f32 (ride otherwise-idle VPU slots).
        sum_h = sum_h + h_l1
        sum_h2 = sum_h2 + h_l1 * h_l1
        return (h_l0, c_l0, h_l1, c_l1, sum_h, sum_h2)

    zero_bh = jnp.zeros((B, H), f32)
    init = (h0_ref[0], c0_ref[0], h0_ref[1], c0_ref[1], zero_bh, zero_bh)
    hf0, cf0, hf1, cf1, sum_h, sum_h2 = lax.fori_loop(0, T, step, init,
                                                      unroll=unroll)
    hN_ref[0] = hf0
    hN_ref[1] = hf1
    cN_ref[0] = cf0
    cN_ref[1] = cf1

    # ---- BN2 statistics (f32 carries; tanh-bounded values, low cancellation) -
    mean2 = jnp.sum(sum_h, axis=0, keepdims=True) / n         # (1, H)
    var2 = jnp.maximum(jnp.sum(sum_h2, axis=0, keepdims=True) / n
                       - mean2 * mean2, 0.0)
    scale2 = g2_ref[...] * lax.rsqrt(var2 + eps)
    shift2 = b2_ref[...] - mean2 * scale2

    # ---- output head: one big GEMM, residual reuses x2d, contiguous store ----
    hn2d = h1_scr[...].reshape(T * B, H).astype(f32) * scale2 + shift2
    y2d = (jnp.dot(hn2d.astype(cdt), wout_ref[...],
                   preferred_element_type=f32)
           + bout_ref[...]
           + x2d)                                             # residual
    y_ref[...] = y2d.reshape(T, B, D)


def _reorder_ifgo_to_ifog(w):
    """Permute PyTorch (i,f,g,o) gate blocks along dim 0 to (i,f,o,g)."""
    H = w.shape[0] // 4
    return jnp.concatenate([w[:2 * H], w[3 * H:], w[2 * H:3 * H]], axis=0)


def _pack_lstm_layer(w_ih, w_hh, b_ih, b_hh, dtype):
    """PyTorch (4H,in)/(4H,) params -> (in,4H)/(H,4H)/(1,4H); gates packed along
    the lane dim in (i,f,o,g) order so one sigmoid covers a contiguous 3H slab."""
    w_ih = _reorder_ifgo_to_ifog(jnp.asarray(w_ih, jnp.float32))
    w_hh = _reorder_ifgo_to_ifog(jnp.asarray(w_hh, jnp.float32))
    b = _reorder_ifgo_to_ifog(jnp.asarray(b_ih, jnp.float32)
                              + jnp.asarray(b_hh, jnp.float32))
    return (w_ih.T.astype(dtype), w_hh.T.astype(dtype),
            b.reshape(1, -1).astype(jnp.float32))


def _default_fuse_recurrent():
    """Fuse the two recurrent dots into one 256-wide push on v6e/v7x; keep the
    two 128-wide dots on v5e and older (128-wide MXU gains nothing)."""
    try:
        kind = jax.devices()[0].device_kind.lower()
    except Exception:
        return True
    return not any(tag in kind for tag in ("v2", "v3", "v4", "v5"))


@functools.partial(jax.jit, static_argnums=(4, 5))
def _rnn_forward_impl(inputs, h0, c0, params, use_bf16, fuse_recurrent):
    B, T, D = inputs.shape
    H = h0.shape[-1]
    cdt = jnp.bfloat16 if use_bf16 else jnp.float32

    # Time-major for the recurrence.  No batch padding and no pad/slice XLA ops
    # around the call (the remaining two transposes are the only wrapper work).
    x_tm = jnp.transpose(inputs.astype(jnp.float32), (1, 0, 2))   # (T, B, D)
    h0f = h0.astype(jnp.float32)
    c0f = c0.astype(jnp.float32)

    wih0, whh0, bg0 = _pack_lstm_layer(params["w_ih_l0"], params["w_hh_l0"],
                                       params["b_ih_l0"], params["b_hh_l0"], cdt)
    wih1, whh1, bg1 = _pack_lstm_layer(params["w_ih_l1"], params["w_hh_l1"],
                                       params["b_ih_l1"], params["b_hh_l1"], cdt)
    wout = jnp.asarray(params["lin_w"], jnp.float32).T.astype(cdt)   # (H, D)
    bout = jnp.asarray(params["lin_b"], jnp.float32).reshape(1, D)

    # Generation-aware VMEM budget (v7x has only 64 MiB/core; v5e/v6e 128 MiB).
    f32b, cb = 4, jnp.dtype(cdt).itemsize
    resident = (2 * T * B * D * f32b                          # x + y
                + T * B * 4 * H * f32b                        # gi scratch
                + T * B * H * cb                              # h1 scratch (bf16)
                + 8 * B * H * f32b                            # h0,c0,hN,cN
                + (D * 4 * H + 3 * H * 4 * H                  # packed weights
                   + 4 * H * 4 * H + H * D) * cb              # (+ fused blockdiag)
                + 16 * 4 * H * f32b)                          # biases / BN params
    try:
        vmem_cap = int(pltpu.get_tpu_info().vmem_capacity_bytes)
    except Exception:
        vmem_cap = 64 << 20                                   # v7x per-core floor
    vmem_limit = int(min(max(2 * resident + (2 << 20), 16 << 20),
                         vmem_cap - (16 << 20)))
    # TODO(synk): for large T, stream x / gi / y in T-chunks (grid over T with
    # BlockSpec double-buffering) and/or store gi_scr in bf16 — needed well
    # before v7x's 64 MiB VMEM is hit; not needed at these shapes.
    # TODO(synk): for B >> 8 add a parallel batch grid axis so v7x's two
    # TensorCores split the recurrence; BN batch statistics couple the batch,
    # so that also needs a cross-core stat reduction (two-phase or CMEM).

    # Capped unroll: full overlap of layer-1(t) with layer-0(t+1) at small T
    # without code-size blowup at large T.
    unroll = T if T <= 8 else 8

    vmem = lambda: pl.BlockSpec(memory_space=pltpu.MemorySpace.VMEM)

    y_tm, hN, cN = pl.pallas_call(
        functools.partial(rnn_model_kernel,
                          fuse_recurrent=fuse_recurrent, unroll=unroll),
        out_shape=(jax.ShapeDtypeStruct((T, B, D), jnp.float32),
                   jax.ShapeDtypeStruct((2, B, H), jnp.float32),
                   jax.ShapeDtypeStruct((2, B, H), jnp.float32)),
        in_specs=[vmem() for _ in range(15)],
        out_specs=(vmem(), vmem(), vmem()),
        scratch_shapes=[pltpu.VMEM((T, B, 4 * H), jnp.float32),
                        pltpu.VMEM((T, B, H), cdt)],
        compiler_params=pltpu.CompilerParams(vmem_limit_bytes=vmem_limit),
    )(x_tm, h0f, c0f,
      jnp.asarray(params["bn1_gamma"], jnp.float32).reshape(1, D),
      jnp.asarray(params["bn1_beta"], jnp.float32).reshape(1, D),
      wih0, whh0, bg0,
      wih1, whh1, bg1,
      jnp.asarray(params["bn2_gamma"], jnp.float32).reshape(1, H),
      jnp.asarray(params["bn2_beta"], jnp.float32).reshape(1, H),
      wout, bout)

    y = jnp.transpose(y_tm, (1, 0, 2))                        # back to (B, T, D)
    return y, (hN, cN)


def rnn_model_forward(inputs, h0, c0, params, use_bf16=True,
                      fuse_recurrent=None):
    """Equivalent of RNNModel.forward(inputs, (h0, c0)) with residual=True.
    NOTE: use_bf16=True keeps weights/MXU operands in bf16 (f32 accumulation),
    so expect ~1e-2 relative difference vs. an f32 PyTorch reference."""
    if fuse_recurrent is None:
        fuse_recurrent = _default_fuse_recurrent()
    if inputs.ndim == 2:                      # 2-D branch of the PyTorch code
        y, state = rnn_model_forward(inputs[:, None, :], h0, c0, params,
                                     use_bf16=use_bf16,
                                     fuse_recurrent=fuse_recurrent)
        return y[:, 0, :], state
    return _rnn_forward_impl(inputs, h0, c0, params,
                             bool(use_bf16), bool(fuse_recurrent))


def init_params(key, dim, hidden):
    """Deterministic synthetic params; shapes follow nn.LSTM / nn.Linear / BN."""
    ks = jax.random.split(key, 10)
    s = 1.0 / (hidden ** 0.5)
    u = lambda k, shape: jax.random.uniform(k, shape, jnp.float32, -s, s)
    return {
        # MyBatchNorm(dim): default affine init (gamma=1, beta=0)
        "bn1_gamma": jnp.ones((dim,), jnp.float32),
        "bn1_beta": jnp.zeros((dim,), jnp.float32),
        # LSTM layer 0
        "w_ih_l0": u(ks[0], (4 * hidden, dim)),
        "w_hh_l0": u(ks[1], (4 * hidden, hidden)),
        "b_ih_l0": u(ks[2], (4 * hidden,)),
        "b_hh_l0": u(ks[3], (4 * hidden,)),
        # LSTM layer 1
        "w_ih_l1": u(ks[4], (4 * hidden, hidden)),
        "w_hh_l1": u(ks[5], (4 * hidden, hidden)),
        "b_ih_l1": u(ks[6], (4 * hidden,)),
        "b_hh_l1": u(ks[7], (4 * hidden,)),
        # MyBatchNorm(hidden)
        "bn2_gamma": jnp.ones((hidden,), jnp.float32),
        "bn2_beta": jnp.zeros((hidden,), jnp.float32),
        # Linear(hidden, dim)
        "lin_w": u(ks[8], (dim, hidden)),
        "lin_b": u(ks[9], (dim,)),
    }


if __name__ == "__main__":
    B, T, D, H = 2, 8, 16, 32
    key = jax.random.PRNGKey(0)
    kx, kp = jax.random.split(key)

    x = jax.random.normal(kx, (B, T, D), jnp.float32)
    params = init_params(kp, D, H)
    # zero_state(batch_size)
    h0 = jnp.zeros((2, B, H), jnp.float32)
    c0 = jnp.zeros((2, B, H), jnp.float32)

    y, (hN, cN) = rnn_model_forward(x, h0, c0, params)
    jax.block_until_ready((y, hN, cN))

    assert y.shape == (B, T, D)
    assert hN.shape == (2, B, H) and cN.shape == (2, B, H)
    assert bool(jnp.all(jnp.isfinite(y)))
    assert bool(jnp.all(jnp.isfinite(hN))) and bool(jnp.all(jnp.isfinite(cN)))
    print("KERNEL_OK")
</pallas_src>

<mosaic_0001>
module attributes {stable_mosaic.version = 11 : i64} {
  func.func @rnn_model_kernel(%arg0: memref<8x2x16xf32, #tpu.memory_space<vmem>>, %arg1: memref<2x2x32xf32, #tpu.memory_space<vmem>>, %arg2: memref<2x2x32xf32, #tpu.memory_space<vmem>>, %arg3: memref<1x16xf32, #tpu.memory_space<vmem>>, %arg4: memref<1x16xf32, #tpu.memory_space<vmem>>, %arg5: memref<16x128xbf16, #tpu.memory_space<vmem>>, %arg6: memref<32x128xbf16, #tpu.memory_space<vmem>>, %arg7: memref<1x128xf32, #tpu.memory_space<vmem>>, %arg8: memref<32x128xbf16, #tpu.memory_space<vmem>>, %arg9: memref<32x128xbf16, #tpu.memory_space<vmem>>, %arg10: memref<1x128xf32, #tpu.memory_space<vmem>>, %arg11: memref<1x32xf32, #tpu.memory_space<vmem>>, %arg12: memref<1x32xf32, #tpu.memory_space<vmem>>, %arg13: memref<32x16xbf16, #tpu.memory_space<vmem>>, %arg14: memref<1x16xf32, #tpu.memory_space<vmem>>, %arg15: memref<8x2x16xf32, #tpu.memory_space<vmem>>, %arg16: memref<2x2x32xf32, #tpu.memory_space<vmem>>, %arg17: memref<2x2x32xf32, #tpu.memory_space<vmem>>, %arg18: memref<8x2x128xf32, #tpu.memory_space<vmem>>, %arg19: memref<8x2x32xbf16, #tpu.memory_space<vmem>>) attributes {dimension_semantics = [], scalar_prefetch = 0 : i64, scratch_operands = 2 : i64, tpu.core_type = #tpu.core_type<tc>} {
    %c0 = arith.constant 0 : index
    %c0_0 = arith.constant 0 : index
    %c0_1 = arith.constant 0 : index
    %0 = vector.load %arg0[%c0, %c0_0, %c0_1] : memref<8x2x16xf32, #tpu.memory_space<vmem>>, vector<8x2x16xf32>
    %1 = vector.shape_cast %0 : vector<8x2x16xf32> to vector<16x16xf32>
    %cst = arith.constant dense<0.000000e+00> : vector<16xf32>
    %2 = vector.multi_reduction <add>, %1, %cst [0] : vector<16x16xf32> to vector<16xf32>
    %3 = vector.shape_cast %2 : vector<16xf32> to vector<1x16xf32>
    %cst_2 = arith.constant 1.600000e+01 : f32
    %4 = vector.broadcast %cst_2 : f32 to vector<1x16xf32>
    %5 = arith.divf %3, %4 : vector<1x16xf32>
    %6 = vector.broadcast %5 : vector<1x16xf32> to vector<16x16xf32>
    %7 = arith.subf %1, %6 : vector<16x16xf32>
    %8 = arith.mulf %7, %7 : vector<16x16xf32>
    %cst_3 = arith.constant dense<0.000000e+00> : vector<16xf32>
    %9 = vector.multi_reduction <add>, %8, %cst_3 [0] : vector<16x16xf32> to vector<16xf32>
    %10 = vector.shape_cast %9 : vector<16xf32> to vector<1x16xf32>
    %cst_4 = arith.constant 1.600000e+01 : f32
    %11 = vector.broadcast %cst_4 : f32 to vector<1x16xf32>
    %12 = arith.divf %10, %11 : vector<1x16xf32>
    %c0_5 = arith.constant 0 : index
    %c0_6 = arith.constant 0 : index
    %13 = vector.load %arg3[%c0_5, %c0_6] : memref<1x16xf32, #tpu.memory_space<vmem>>, vector<1x16xf32>
    %cst_7 = arith.constant 9.99999974E-6 : f32
    %14 = vector.broadcast %cst_7 : f32 to vector<1x16xf32>
    %15 = arith.addf %12, %14 : vector<1x16xf32>
    %16 = math.rsqrt %15 : vector<1x16xf32>
    %17 = arith.mulf %13, %16 : vector<1x16xf32>
    %18 = vector.broadcast %17 : vector<1x16xf32> to vector<16x16xf32>
    %19 = arith.mulf %7, %18 : vector<16x16xf32>
    %c0_8 = arith.constant 0 : index
    %c0_9 = arith.constant 0 : index
    %20 = vector.load %arg4[%c0_8, %c0_9] : memref<1x16xf32, #tpu.memory_space<vmem>>, vector<1x16xf32>
    %21 = vector.broadcast %20 : vector<1x16xf32> to vector<16x16xf32>
    %22 = arith.addf %19, %21 : vector<16x16xf32>
    %23 = arith.truncf %22 : vector<16x16xf32> to vector<16x16xbf16>
    %c0_10 = arith.constant 0 : index
    %c0_11 = arith.constant 0 : index
    %24 = vector.load %arg5[%c0_10, %c0_11] : memref<16x128xbf16, #tpu.memory_space<vmem>>, vector<16x128xbf16>
    %cst_12 = arith.constant dense<0.000000e+00> : vector<16x128xf32>
    %25 = tpu.matmul %23, %24, %cst_12 {dimension_numbers = #tpu.dot_dimension_numbers<[1], [0], [0], [1], [0, 0, 1, 1], [], []>} : vector<16x16xbf16>, vector<16x128xbf16>, vector<16x128xf32> -> vector<16x128xf32>
    %c0_13 = arith.constant 0 : index
    %c0_14 = arith.constant 0 : index
    %26 = vector.load %arg7[%c0_13, %c0_14] : memref<1x128xf32, #tpu.memory_space<vmem>>, vector<1x128xf32>
    %27 = vector.broadcast %26 : vector<1x128xf32> to vector<16x128xf32>
    %28 = arith.addf %25, %27 : vector<16x128xf32>
    %29 = vector.shape_cast %28 : vector<16x128xf32> to vector<8x2x128xf32>
    %c0_15 = arith.constant 0 : index
    %c0_16 = arith.constant 0 : index
    %c0_17 = arith.constant 0 : index
    %30 = vector.load %arg18[%c0_15, %c0_16, %c0_17] : memref<8x2x128xf32, #tpu.memory_space<vmem>>, vector<8x2x128xf32>
    tpu.vector_store %arg18[%c0_15, %c0_16, %c0_17], %29 {strides = array<i32>} : memref<8x2x128xf32, #tpu.memory_space<vmem>>, vector<8x2x128xf32>,
    %c0_18 = arith.constant 0 : index
    %c0_19 = arith.constant 0 : index
    %31 = vector.load %arg6[%c0_18, %c0_19] : memref<32x128xbf16, #tpu.memory_space<vmem>>, vector<32x128xbf16>
    %c0_20 = arith.constant 0 : index
    %c0_21 = arith.constant 0 : index
    %32 = vector.load %arg8[%c0_20, %c0_21] : memref<32x128xbf16, #tpu.memory_space<vmem>>, vector<32x128xbf16>
    %c0_22 = arith.constant 0 : index
    %c0_23 = arith.constant 0 : index
    %33 = vector.load %arg9[%c0_22, %c0_23] : memref<32x128xbf16, #tpu.memory_space<vmem>>, vector<32x128xbf16>
    %c0_24 = arith.constant 0 : index
    %c0_25 = arith.constant 0 : index
    %34 = vector.load %arg10[%c0_24, %c0_25] : memref<1x128xf32, #tpu.memory_space<vmem>>, vector<1x128xf32>
    %cst_26 = arith.constant 0.000000e+00 : bf16
    %35 = vector.broadcast %cst_26 : bf16 to vector<32x128xbf16>
    %36 = tpu.concatenate %31, %35 in 1 : vector<32x128xbf16>, vector<32x128xbf16> -> vector<32x256xbf16>
    %37 = tpu.concatenate %35, %33 in 1 : vector<32x128xbf16>, vector<32x128xbf16> -> vector<32x256xbf16>
    %38 = tpu.concatenate %36, %37 in 0 : vector<32x256xbf16>, vector<32x256xbf16> -> vector<64x256xbf16>
    %cst_27 = arith.constant 0.000000e+00 : f32
    %39 = vector.broadcast %cst_27 : f32 to vector<2x32xf32>
    %c0_28 = arith.constant 0 : index
    %c0_29 = arith.constant 0 : index
    %c0_30 = arith.constant 0 : index
    %40 = vector.load %arg1[%c0_28, %c0_29, %c0_30] : memref<2x2x32xf32, #tpu.memory_space<vmem>>, vector<1x2x32xf32>
    %41 = vector.shape_cast %40 : vector<1x2x32xf32> to vector<2x32xf32>
    %c0_31 = arith.constant 0 : index
    %c0_32 = arith.constant 0 : index
    %c0_33 = arith.constant 0 : index
    %42 = vector.load %arg2[%c0_31, %c0_32, %c0_33] : memref<2x2x32xf32, #tpu.memory_space<vmem>>, vector<1x2x32xf32>
    %43 = vector.shape_cast %42 : vector<1x2x32xf32> to vector<2x32xf32>
    %c1 = arith.constant 1 : index
    %c0_34 = arith.constant 0 : index
    %c0_35 = arith.constant 0 : index
    %44 = vector.load %arg1[%c1, %c0_34, %c0_35] : memref<2x2x32xf32, #tpu.memory_space<vmem>>, vector<1x2x32xf32>
    %45 = vector.shape_cast %44 : vector<1x2x32xf32> to vector<2x32xf32>
    %c1_36 = arith.constant 1 : index
    %c0_37 = arith.constant 0 : index
    %c0_38 = arith.constant 0 : index
    %46 = vector.load %arg2[%c1_36, %c0_37, %c0_38] : memref<2x2x32xf32, #tpu.memory_space<vmem>>, vector<1x2x32xf32>
    %47 = vector.shape_cast %46 : vector<1x2x32xf32> to vector<2x32xf32>
    %c0_i32 = arith.constant 0 : i32
    %48 = tpu.concatenate %41, %45 in 1 : vector<2x32xf32>, vector<2x32xf32> -> vector<2x64xf32>
    %49 = arith.truncf %48 : vector<2x64xf32> to vector<2x64xbf16>
    %cst_39 = arith.constant dense<0.000000e+00> : vector<2x256xf32>
    %50 = tpu.matmul %49, %38, %cst_39 {dimension_numbers = #tpu.dot_dimension_numbers<[1], [0], [0], [1], [0, 0, 1, 1], [], []>} : vector<2x64xbf16>, vector<64x256xbf16>, vector<2x256xf32> -> vector<2x256xf32>
    %51 = arith.index_cast %c0_i32 : i32 to index
    %c0_40 = arith.constant 0 : index
    %c0_41 = arith.constant 0 : index
    %52 = vector.load %arg18[%51, %c0_40, %c0_41] : memref<8x2x128xf32, #tpu.memory_space<vmem>>, vector<1x2x128xf32>
    %53 = vector.shape_cast %52 : vector<1x2x128xf32> to vector<2x128xf32>
    %54 = vector.extract_strided_slice %50 {offsets = [0, 0], sizes = [2, 128], strides = [1, 1]} : vector<2x256xf32> to vector<2x128xf32>
    %55 = arith.addf %53, %54 : vector<2x128xf32>
    %56 = vector.extract_strided_slice %55 {offsets = [0, 0], sizes = [2, 96], strides = [1, 1]} : vector<2x128xf32> to vector<2x96xf32>
    %57 = arith.negf %56 : vector<2x96xf32>
    %58 = math.exp %57 : vector<2x96xf32>
    %cst_42 = arith.constant 1.000000e+00 : f32
    %59 = vector.broadcast %cst_42 : f32 to vector<2x96xf32>
    %60 = arith.addf %59, %58 : vector<2x96xf32>
    %61 = arith.divf %59, %60 : vector<2x96xf32>
    %62 = vector.extract_strided_slice %55 {offsets = [0, 96], sizes = [2, 32], strides = [1, 1]} : vector<2x128xf32> to vector<2x32xf32>
    %63 = math.tanh %62 : vector<2x32xf32>
    %64 = vector.extract_strided_slice %61 {offsets = [0, 32], sizes = [2, 32], strides = [1, 1]} : vector<2x96xf32> to vector<2x32xf32>
    %65 = arith.mulf %64, %43 : vector<2x32xf32>
    %66 = vector.extract_strided_slice %61 {offsets = [0, 0], sizes = [2, 32], strides = [1, 1]} : vector<2x96xf32> to vector<2x32xf32>
    %67 = arith.mulf %66, %63 : vector<2x32xf32>
    %68 = arith.addf %65, %67 : vector<2x32xf32>
    %69 = vector.extract_strided_slice %61 {offsets = [0, 64], sizes = [2, 32], strides = [1, 1]} : vector<2x96xf32> to vector<2x32xf32>
    %70 = math.tanh %68 : vector<2x32xf32>
    %71 = arith.mulf %69, %70 : vector<2x32xf32>
    %72 = arith.truncf %71 : vector<2x32xf32> to vector<2x32xbf16>
    %cst_43 = arith.constant dense<0.000000e+00> : vector<2x128xf32>
    %73 = tpu.matmul %72, %32, %cst_43 {dimension_numbers = #tpu.dot_dimension_numbers<[1], [0], [0], [1], [0, 0, 1, 1], [], []>} : vector<2x32xbf16>, vector<32x128xbf16>, vector<2x128xf32> -> vector<2x128xf32>
    %74 = vector.extract_strided_slice %50 {offsets = [0, 128], sizes = [2, 128], strides = [1, 1]} : vector<2x256xf32> to vector<2x128xf32>
    %75 = arith.addf %73, %74 : vector<2x128xf32>
    %76 = vector.broadcast %34 : vector<1x128xf32> to vector<2x128xf32>
    %77 = arith.addf %75, %76 : vector<2x128xf32>
    %78 = vector.extract_strided_slice %77 {offsets = [0, 0], sizes = [2, 96], strides = [1, 1]} : vector<2x128xf32> to vector<2x96xf32>
    %79 = arith.negf %78 : vector<2x96xf32>
    %80 = math.exp %79 : vector<2x96xf32>
    %cst_44 = arith.constant 1.000000e+00 : f32
    %81 = vector.broadcast %cst_44 : f32 to vector<2x96xf32>
    %82 = arith.addf %81, %80 : vector<2x96xf32>
    %83 = arith.divf %81, %82 : vector<2x96xf32>
    %84 = vector.extract_strided_slice %77 {offsets = [0, 96], sizes = [2, 32], strides = [1, 1]} : vector<2x128xf32> to vector<2x32xf32>
    %85 = math.tanh %84 : vector<2x32xf32>
    %86 = vector.extract_strided_slice %83 {offsets = [0, 32], sizes = [2, 32], strides = [1, 1]} : vector<2x96xf32> to vector<2x32xf32>
    %87 = arith.mulf %86, %47 : vector<2x32xf32>
    %88 = vector.extract_strided_slice %83 {offsets = [0, 0], sizes = [2, 32], strides = [1, 1]} : vector<2x96xf32> to vector<2x32xf32>
    %89 = arith.mulf %88, %85 : vector<2x32xf32>
    %90 = arith.addf %87, %89 : vector<2x32xf32>
    %91 = vector.extract_strided_slice %83 {offsets = [0, 64], sizes = [2, 32], strides = [1, 1]} : vector<2x96xf32> to vector<2x32xf32>
    %92 = math.tanh %90 : vector<2x32xf32>
    %93 = arith.mulf %91, %92 : vector<2x32xf32>
    %94 = arith.truncf %93 : vector<2x32xf32> to vector<2x32xbf16>
    %95 = arith.index_cast %c0_i32 : i32 to index
    %c0_45 = arith.constant 0 : index
    %c0_46 = arith.constant 0 : index
    %96 = vector.load %arg19[%95, %c0_45, %c0_46] : memref<8x2x32xbf16, #tpu.memory_space<vmem>>, vector<1x2x32xbf16>
    %97 = vector.shape_cast %96 : vector<1x2x32xbf16> to vector<2x32xbf16>
    %98 = vector.shape_cast %94 : vector<2x32xbf16> to vector<1x2x32xbf16>
    tpu.vector_store %arg19[%95, %c0_45, %c0_46], %98 {strides = array<i32>} : memref<8x2x32xbf16, #tpu.memory_space<vmem>>, vector<1x2x32xbf16>,
    %99 = arith.addf %39, %93 : vector<2x32xf32>
    %100 = arith.mulf %93, %93 : vector<2x32xf32>
    %101 = arith.addf %39, %100 : vector<2x32xf32>
    %c1_i32 = arith.constant 1 : i32
    %102 = tpu.concatenate %71, %93 in 1 : vector<2x32xf32>, vector<2x32xf32> -> vector<2x64xf32>
    %103 = arith.truncf %102 : vector<2x64xf32> to vector<2x64xbf16>
    %cst_47 = arith.constant dense<0.000000e+00> : vector<2x256xf32>
    %104 = tpu.matmul %103, %38, %cst_47 {dimension_numbers = #tpu.dot_dimension_numbers<[1], [0], [0], [1], [0, 0, 1, 1], [], []>} : vector<2x64xbf16>, vector<64x256xbf16>, vector<2x256xf32> -> vector<2x256xf32>
    %105 = arith.index_cast %c1_i32 : i32 to index
    %c0_48 = arith.constant 0 : index
    %c0_49 = arith.constant 0 : index
    %106 = vector.load %arg18[%105, %c0_48, %c0_49] : memref<8x2x128xf32, #tpu.memory_space<vmem>>, vector<1x2x128xf32>
    %107 = vector.shape_cast %106 : vector<1x2x128xf32> to vector<2x128xf32>
    %108 = vector.extract_strided_slice %104 {offsets = [0, 0], sizes = [2, 128], strides = [1, 1]} : vector<2x256xf32> to vector<2x128xf32>
    %109 = arith.addf %107, %108 : vector<2x128xf32>
    %110 = vector.extract_strided_slice %109 {offsets = [0, 0], sizes = [2, 96], strides = [1, 1]} : vector<2x128xf32> to vector<2x96xf32>
    %111 = arith.negf %110 : vector<2x96xf32>
    %112 = math.exp %111 : vector<2x96xf32>
    %cst_50 = arith.constant 1.000000e+00 : f32
    %113 = vector.broadcast %cst_50 : f32 to vector<2x96xf32>
    %114 = arith.addf %113, %112 : vector<2x96xf32>
    %115 = arith.divf %113, %114 : vector<2x96xf32>
    %116 = vector.extract_strided_slice %109 {offsets = [0, 96], sizes = [2, 32], strides = [1, 1]} : vector<2x128xf32> to vector<2x32xf32>
    %117 = math.tanh %116 : vector<2x32xf32>
    %118 = vector.extract_strided_slice %115 {offsets = [0, 32], sizes = [2, 32], strides = [1, 1]} : vector<2x96xf32> to vector<2x32xf32>
    %119 = arith.mulf %118, %68 : vector<2x32xf32>
    %120 = vector.extract_strided_slice %115 {offsets = [0, 0], sizes = [2, 32], strides = [1, 1]} : vector<2x96xf32> to vector<2x32xf32>
    %121 = arith.mulf %120, %117 : vector<2x32xf32>
    %122 = arith.addf %119, %121 : vector<2x32xf32>
    %123 = vector.extract_strided_slice %115 {offsets = [0, 64], sizes = [2, 32], strides = [1, 1]} : vector<2x96xf32> to vector<2x32xf32>
    %124 = math.tanh %122 : vector<2x32xf32>
    %125 = arith.mulf %123, %124 : vector<2x32xf32>
    %126 = arith.truncf %125 : vector<2x32xf32> to vector<2x32xbf16>
    %cst_51 = arith.constant dense<0.000000e+00> : vector<2x128xf32>
    %127 = tpu.matmul %126, %32, %cst_51 {dimension_numbers = #tpu.dot_dimension_numbers<[1], [0], [0], [1], [0, 0, 1, 1], [], []>} : vector<2x32xbf16>, vector<32x128xbf16>, vector<2x128xf32> -> vector<2x128xf32>
    %128 = vector.extract_strided_slice %104 {offsets = [0, 128], sizes = [2, 128], strides = [1, 1]} : vector<2x256xf32> to vector<2x128xf32>
    %129 = arith.addf %127, %128 : vector<2x128xf32>
    %130 = vector.broadcast %34 : vector<1x128xf32> to vector<2x128xf32>
    %131 = arith.addf %129, %130 : vector<2x128xf32>
    %132 = vector.extract_strided_slice %131 {offsets = [0, 0], sizes = [2, 96], strides = [1, 1]} : vector<2x128xf32> to vector<2x96xf32>
    %133 = arith.negf %132 : vector<2x96xf32>
    %134 = math.exp %133 : vector<2x96xf32>
    %cst_52 = arith.constant 1.000000e+00 : f32
    %135 = vector.broadcast %cst_52 : f32 to vector<2x96xf32>
    %136 = arith.addf %135, %134 : vector<2x96xf32>
    %137 = arith.divf %135, %136 : vector<2x96xf32>
    %138 = vector.extract_strided_slice %131 {offsets = [0, 96], sizes = [2, 32], strides = [1, 1]} : vector<2x128xf32> to vector<2x32xf32>
    %139 = math.tanh %138 : vector<2x32xf32>
    %140 = vector.extract_strided_slice %137 {offsets = [0, 32], sizes = [2, 32], strides = [1, 1]} : vector<2x96xf32> to vector<2x32xf32>
    %141 = arith.mulf %140, %90 : vector<2x32xf32>
    %142 = vector.extract_strided_slice %137 {offsets = [0, 0], sizes = [2, 32], strides = [1, 1]} : vector<2x96xf32> to vector<2x32xf32>
    %143 = arith.mulf %142, %139 : vector<2x32xf32>
    %144 = arith.addf %141, %143 : vector<2x32xf32>
    %145 = vector.extract_strided_slice %137 {offsets = [0, 64], sizes = [2, 32], strides = [1, 1]} : vector<2x96xf32> to vector<2x32xf32>
    %146 = math.tanh %144 : vector<2x32xf32>
    %147 = arith.mulf %145, %146 : vector<2x32xf32>
    %148 = arith.truncf %147 : vector<2x32xf32> to vector<2x32xbf16>
    %149 = arith.index_cast %c1_i32 : i32 to index
    %c0_53 = arith.constant 0 : index
    %c0_54 = arith.constant 0 : index
    %150 = vector.load %arg19[%149, %c0_53, %c0_54] : memref<8x2x32xbf16, #tpu.memory_space<vmem>>, vector<1x2x32xbf16>
    %151 = vector.shape_cast %150 : vector<1x2x32xbf16> to vector<2x32xbf16>
    %152 = vector.shape_cast %148 : vector<2x32xbf16> to vector<1x2x32xbf16>
    tpu.vector_store %arg19[%149, %c0_53, %c0_54], %152 {strides = array<i32>} : memref<8x2x32xbf16, #tpu.memory_space<vmem>>, vector<1x2x32xbf16>,
    %153 = arith.addf %99, %147 : vector<2x32xf32>
    %154 = arith.mulf %147, %147 : vector<2x32xf32>
    %155 = arith.addf %101, %154 : vector<2x32xf32>
    %c2_i32 = arith.constant 2 : i32
    %156 = tpu.concatenate %125, %147 in 1 : vector<2x32xf32>, vector<2x32xf32> -> vector<2x64xf32>
    %157 = arith.truncf %156 : vector<2x64xf32> to vector<2x64xbf16>
    %cst_55 = arith.constant dense<0.000000e+00> : vector<2x256xf32>
    %158 = tpu.matmul %157, %38, %cst_55 {dimension_numbers = #tpu.dot_dimension_numbers<[1], [0], [0], [1], [0, 0, 1, 1], [], []>} : vector<2x64xbf16>, vector<64x256xbf16>, vector<2x256xf32> -> vector<2x256xf32>
    %159 = arith.index_cast %c2_i32 : i32 to index
    %c0_56 = arith.constant 0 : index
    %c0_57 = arith.constant 0 : index
    %160 = vector.load %arg18[%159, %c0_56, %c0_57] : memref<8x2x128xf32, #tpu.memory_space<vmem>>, vector<1x2x128xf32>
    %161 = vector.shape_cast %160 : vector<1x2x128xf32> to vector<2x128xf32>
    %162 = vector.extract_strided_slice %158 {offsets = [0, 0], sizes = [2, 128], strides = [1, 1]} : vector<2x256xf32> to vector<2x128xf32>
    %163 = arith.addf %161, %162 : vector<2x128xf32>
    %164 = vector.extract_strided_slice %163 {offsets = [0, 0], sizes = [2, 96], strides = [1, 1]} : vector<2x128xf32> to vector<2x96xf32>
    %165 = arith.negf %164 : vector<2x96xf32>
    %166 = math.exp %165 : vector<2x96xf32>
    %cst_58 = arith.constant 1.000000e+00 : f32
    %167 = vector.broadcast %cst_58 : f32 to vector<2x96xf32>
    %168 = arith.addf %167, %166 : vector<2x96xf32>
    %169 = arith.divf %167, %168 : vector<2x96xf32>
    %170 = vector.extract_strided_slice %163 {offsets = [0, 96], sizes = [2, 32], strides = [1, 1]} : vector<2x128xf32> to vector<2x32xf32>
    %171 = math.tanh %170 : vector<2x32xf32>
    %172 = vector.extract_strided_slice %169 {offsets = [0, 32], sizes = [2, 32], strides = [1, 1]} : vector<2x96xf32> to vector<2x32xf32>
    %173 = arith.mulf %172, %122 : vector<2x32xf32>
    %174 = vector.extract_strided_slice %169 {offsets = [0, 0], sizes = [2, 32], strides = [1, 1]} : vector<2x96xf32> to vector<2x32xf32>
    %175 = arith.mulf %174, %171 : vector<2x32xf32>
    %176 = arith.addf %173, %175 : vector<2x32xf32>
    %177 = vector.extract_strided_slice %169 {offsets = [0, 64], sizes = [2, 32], strides = [1, 1]} : vector<2x96xf32> to vector<2x32xf32>
    %178 = math.tanh %176 : vector<2x32xf32>
    %179 = arith.mulf %177, %178 : vector<2x32xf32>
    %180 = arith.truncf %179 : vector<2x32xf32> to vector<2x32xbf16>
    %cst_59 = arith.constant dense<0.000000e+00> : vector<2x128xf32>
    %181 = tpu.matmul %180, %32, %cst_59 {dimension_numbers = #tpu.dot_dimension_numbers<[1], [0], [0], [1], [0, 0, 1, 1], [], []>} : vector<2x32xbf16>, vector<32x128xbf16>, vector<2x128xf32> -> vector<2x128xf32>
    %182 = vector.extract_strided_slice %158 {offsets = [0, 128], sizes = [2, 128], strides = [1, 1]} : vector<2x256xf32> to vector<2x128xf32>
    %183 = arith.addf %181, %182 : vector<2x128xf32>
    %184 = vector.broadcast %34 : vector<1x128xf32> to vector<2x128xf32>
    %185 = arith.addf %183, %184 : vector<2x128xf32>
    %186 = vector.extract_strided_slice %185 {offsets = [0, 0], sizes = [2, 96], strides = [1, 1]} : vector<2x128xf32> to vector<2x96xf32>
    %187 = arith.negf %186 : vector<2x96xf32>
    %188 = math.exp %187 : vector<2x96xf32>
    %cst_60 = arith.constant 1.000000e+00 : f32
    %189 = vector.broadcast %cst_60 : f32 to vector<2x96xf32>
    %190 = arith.addf %189, %188 : vector<2x96xf32>
    %191 = arith.divf %189, %190 : vector<2x96xf32>
    %192 = vector.extract_strided_slice %185 {offsets = [0, 96], sizes = [2, 32], strides = [1, 1]} : vector<2x128xf32> to vector<2x32xf32>
    %193 = math.tanh %192 : vector<2x32xf32>
    %194 = vector.extract_strided_slice %191 {offsets = [0, 32], sizes = [2, 32], strides = [1, 1]} : vector<2x96xf32> to vector<2x32xf32>
    %195 = arith.mulf %194, %144 : vector<2x32xf32>
    %196 = vector.extract_strided_slice %191 {offsets = [0, 0], sizes = [2, 32], strides = [1, 1]} : vector<2x96xf32> to vector<2x32xf32>
    %197 = arith.mulf %196, %193 : vector<2x32xf32>
    %198 = arith.addf %195, %197 : vector<2x32xf32>
    %199 = vector.extract_strided_slice %191 {offsets = [0, 64], sizes = [2, 32], strides = [1, 1]} : vector<2x96xf32> to vector<2x32xf32>
    %200 = math.tanh %198 : vector<2x32xf32>
    %201 = arith.mulf %199, %200 : vector<2x32xf32>
    %202 = arith.truncf %201 : vector<2x32xf32> to vector<2x32xbf16>
    %203 = arith.index_cast %c2_i32 : i32 to index
    %c0_61 = arith.constant 0 : index
    %c0_62 = arith.constant 0 : index
    %204 = vector.load %arg19[%203, %c0_61, %c0_62] : memref<8x2x32xbf16, #tpu.memory_space<vmem>>, vector<1x2x32xbf16>
    %205 = vector.shape_cast %204 : vector<1x2x32xbf16> to vector<2x32xbf16>
    %206 = vector.shape_cast %202 : vector<2x32xbf16> to vector<1x2x32xbf16>
    tpu.vector_store %arg19[%203, %c0_61, %c0_62], %206 {strides = array<i32>} : memref<8x2x32xbf16, #tpu.memory_space<vmem>>, vector<1x2x32xbf16>,
    %207 = arith.addf %153, %201 : vector<2x32xf32>
    %208 = arith.mulf %201, %201 : vector<2x32xf32>
    %209 = arith.addf %155, %208 : vector<2x32xf32>
    %c3_i32 = arith.constant 3 : i32
    %210 = tpu.concatenate %179, %201 in 1 : vector<2x32xf32>, vector<2x32xf32> -> vector<2x64xf32>
    %211 = arith.truncf %210 : vector<2x64xf32> to vector<2x64xbf16>
    %cst_63 = arith.constant dense<0.000000e+00> : vector<2x256xf32>
    %212 = tpu.matmul %211, %38, %cst_63 {dimension_numbers = #tpu.dot_dimension_numbers<[1], [0], [0], [1], [0, 0, 1, 1], [], []>} : vector<2x64xbf16>, vector<64x256xbf16>, vector<2x256xf32> -> vector<2x256xf32>
    %213 = arith.index_cast %c3_i32 : i32 to index
    %c0_64 = arith.constant 0 : index
    %c0_65 = arith.constant 0 : index
    %214 = vector.load %arg18[%213, %c0_64, %c0_65] : memref<8x2x128xf32, #tpu.memory_space<vmem>>, vector<1x2x128xf32>
    %215 = vector.shape_cast %214 : vector<1x2x128xf32> to vector<2x128xf32>
    %216 = vector.extract_strided_slice %212 {offsets = [0, 0], sizes = [2, 128], strides = [1, 1]} : vector<2x256xf32> to vector<2x128xf32>
    %217 = arith.addf %215, %216 : vector<2x128xf32>
    %218 = vector.extract_strided_slice %217 {offsets = [0, 0], sizes = [2, 96], strides = [1, 1]} : vector<2x128xf32> to vector<2x96xf32>
    %219 = arith.negf %218 : vector<2x96xf32>
    %220 = math.exp %219 : vector<2x96xf32>
    %cst_66 = arith.constant 1.000000e+00 : f32
    %221 = vector.broadcast %cst_66 : f32 to vector<2x96xf32>
    %222 = arith.addf %221, %220 : vector<2x96xf32>
    %223 = arith.divf %221, %222 : vector<2x96xf32>
    %224 = vector.extract_strided_slice %217 {offsets = [0, 96], sizes = [2, 32], strides = [1, 1]} : vector<2x128xf32> to vector<2x32xf32>
    %225 = math.tanh %224 : vector<2x32xf32>
    %226 = vector.extract_strided_slice %223 {offsets = [0, 32], sizes = [2, 32], strides = [1, 1]} : vector<2x96xf32> to vector<2x32xf32>
    %227 = arith.mulf %226, %176 : vector<2x32xf32>
    %228 = vector.extract_strided_slice %223 {offsets = [0, 0], sizes = [2, 32], strides = [1, 1]} : vector<2x96xf32> to vector<2x32xf32>
    %229 = arith.mulf %228, %225 : vector<2x32xf32>
    %230 = arith.addf %227, %229 : vector<2x32xf32>
    %231 = vector.extract_strided_slice %223 {offsets = [0, 64], sizes = [2, 32], strides = [1, 1]} : vector<2x96xf32> to vector<2x32xf32>
    %232 = math.tanh %230 : vector<2x32xf32>
    %233 = arith.mulf %231, %232 : vector<2x32xf32>
    %234 = arith.truncf %233 : vector<2x32xf32> to vector<2x32xbf16>
    %cst_67 = arith.constant dense<0.000000e+00> : vector<2x128xf32>
    %235 = tpu.matmul %234, %32, %cst_67 {dimension_numbers = #tpu.dot_dimension_numbers<[1], [0], [0], [1], [0, 0, 1, 1], [], []>} : vector<2x32xbf16>, vector<32x128xbf16>, vector<2x128xf32> -> vector<2x128xf32>
    %236 = vector.extract_strided_slice %212 {offsets = [0, 128], sizes = [2, 128], strides = [1, 1]} : vector<2x256xf32> to vector<2x128xf32>
    %237 = arith.addf %235, %236 : vector<2x128xf32>
    %238 = vector.broadcast %34 : vector<1x128xf32> to vector<2x128xf32>
    %239 = arith.addf %237, %238 : vector<2x128xf32>
    %240 = vector.extract_strided_slice %239 {offsets = [0, 0], sizes = [2, 96], strides = [1, 1]} : vector<2x128xf32> to vector<2x96xf32>
    %241 = arith.negf %240 : vector<2x96xf32>
    %242 = math.exp %241 : vector<2x96xf32>
    %cst_68 = arith.constant 1.000000e+00 : f32
    %243 = vector.broadcast %cst_68 : f32 to vector<2x96xf32>
    %244 = arith.addf %243, %242 : vector<2x96xf32>
    %245 = arith.divf %243, %244 : vector<2x96xf32>
    %246 = vector.extract_strided_slice %239 {offsets = [0, 96], sizes = [2, 32], strides = [1, 1]} : vector<2x128xf32> to vector<2x32xf32>
    %247 = math.tanh %246 : vector<2x32xf32>
    %248 = vector.extract_strided_slice %245 {offsets = [0, 32], sizes = [2, 32], strides = [1, 1]} : vector<2x96xf32> to vector<2x32xf32>
    %249 = arith.mulf %248, %198 : vector<2x32xf32>
    %250 = vector.extract_strided_slice %245 {offsets = [0, 0], sizes = [2, 32], strides = [1, 1]} : vector<2x96xf32> to vector<2x32xf32>
    %251 = arith.mulf %250, %247 : vector<2x32xf32>
    %252 = arith.addf %249, %251 : vector<2x32xf32>
    %253 = vector.extract_strided_slice %245 {offsets = [0, 64], sizes = [2, 32], strides = [1, 1]} : vector<2x96xf32> to vector<2x32xf32>
    %254 = math.tanh %252 : vector<2x32xf32>
    %255 = arith.mulf %253, %254 : vector<2x32xf32>
    %256 = arith.truncf %255 : vector<2x32xf32> to vector<2x32xbf16>
    %257 = arith.index_cast %c3_i32 : i32 to index
    %c0_69 = arith.constant 0 : index
    %c0_70 = arith.constant 0 : index
    %258 = vector.load %arg19[%257, %c0_69, %c0_70] : memref<8x2x32xbf16, #tpu.memory_space<vmem>>, vector<1x2x32xbf16>
    %259 = vector.shape_cast %258 : vector<1x2x32xbf16> to vector<2x32xbf16>
    %260 = vector.shape_cast %256 : vector<2x32xbf16> to vector<1x2x32xbf16>
    tpu.vector_store %arg19[%257, %c0_69, %c0_70], %260 {strides = array<i32>} : memref<8x2x32xbf16, #tpu.memory_space<vmem>>, vector<1x2x32xbf16>,
    %261 = arith.addf %207, %255 : vector<2x32xf32>
    %262 = arith.mulf %255, %255 : vector<2x32xf32>
    %263 = arith.addf %209, %262 : vector<2x32xf32>
    %c4_i32 = arith.constant 4 : i32
    %264 = tpu.concatenate %233, %255 in 1 : vector<2x32xf32>, vector<2x32xf32> -> vector<2x64xf32>
    %265 = arith.truncf %264 : vector<2x64xf32> to vector<2x64xbf16>
    %cst_71 = arith.constant dense<0.000000e+00> : vector<2x256xf32>
    %266 = tpu.matmul %265, %38, %cst_71 {dimension_numbers = #tpu.dot_dimension_numbers<[1], [0], [0], [1], [0, 0, 1, 1], [], []>} : vector<2x64xbf16>, vector<64x256xbf16>, vector<2x256xf32> -> vector<2x256xf32>
    %267 = arith.index_cast %c4_i32 : i32 to index
    %c0_72 = arith.constant 0 : index
    %c0_73 = arith.constant 0 : index
    %268 = vector.load %arg18[%267, %c0_72, %c0_73] : memref<8x2x128xf32, #tpu.memory_space<vmem>>, vector<1x2x128xf32>
    %269 = vector.shape_cast %268 : vector<1x2x128xf32> to vector<2x128xf32>
    %270 = vector.extract_strided_slice %266 {offsets = [0, 0], sizes = [2, 128], strides = [1, 1]} : vector<2x256xf32> to vector<2x128xf32>
    %271 = arith.addf %269, %270 : vector<2x128xf32>
    %272 = vector.extract_strided_slice %271 {offsets = [0, 0], sizes = [2, 96], strides = [1, 1]} : vector<2x128xf32> to vector<2x96xf32>
    %273 = arith.negf %272 : vector<2x96xf32>
    %274 = math.exp %273 : vector<2x96xf32>
    %cst_74 = arith.constant 1.000000e+00 : f32
    %275 = vector.broadcast %cst_74 : f32 to vector<2x96xf32>
    %276 = arith.addf %275, %274 : vector<2x96xf32>
    %277 = arith.divf %275, %276 : vector<2x96xf32>
    %278 = vector.extract_strided_slice %271 {offsets = [0, 96], sizes = [2, 32], strides = [1, 1]} : vector<2x128xf32> to vector<2x32xf32>
    %279 = math.tanh %278 : vector<2x32xf32>
    %280 = vector.extract_strided_slice %277 {offsets = [0, 32], sizes = [2, 32], strides = [1, 1]} : vector<2x96xf32> to vector<2x32xf32>
    %281 = arith.mulf %280, %230 : vector<2x32xf32>
    %282 = vector.extract_strided_slice %277 {offsets = [0, 0], sizes = [2, 32], strides = [1, 1]} : vector<2x96xf32> to vector<2x32xf32>
    %283 = arith.mulf %282, %279 : vector<2x32xf32>
    %284 = arith.addf %281, %283 : vector<2x32xf32>
    %285 = vector.extract_strided_slice %277 {offsets = [0, 64], sizes = [2, 32], strides = [1, 1]} : vector<2x96xf32> to vector<2x32xf32>
    %286 = math.tanh %284 : vector<2x32xf32>
    %287 = arith.mulf %285, %286 : vector<2x32xf32>
    %288 = arith.truncf %287 : vector<2x32xf32> to vector<2x32xbf16>
    %cst_75 = arith.constant dense<0.000000e+00> : vector<2x128xf32>
    %289 = tpu.matmul %288, %32, %cst_75 {dimension_numbers = #tpu.dot_dimension_numbers<[1], [0], [0], [1], [0, 0, 1, 1], [], []>} : vector<2x32xbf16>, vector<32x128xbf16>, vector<2x128xf32> -> vector<2x128xf32>
    %290 = vector.extract_strided_slice %266 {offsets = [0, 128], sizes = [2, 128], strides = [1, 1]} : vector<2x256xf32> to vector<2x128xf32>
    %291 = arith.addf %289, %290 : vector<2x128xf32>
    %292 = vector.broadcast %34 : vector<1x128xf32> to vector<2x128xf32>
    %293 = arith.addf %291, %292 : vector<2x128xf32>
    %294 = vector.extract_strided_slice %293 {offsets = [0, 0], sizes = [2, 96], strides = [1, 1]} : vector<2x128xf32> to vector<2x96xf32>
    %295 = arith.negf %294 : vector<2x96xf32>
    %296 = math.exp %295 : vector<2x96xf32>
    %cst_76 = arith.constant 1.000000e+00 : f32
    %297 = vector.broadcast %cst_76 : f32 to vector<2x96xf32>
    %298 = arith.addf %297, %296 : vector<2x96xf32>
    %299 = arith.divf %297, %298 : vector<2x96xf32>
    %300 = vector.extract_strided_slice %293 {offsets = [0, 96], sizes = [2, 32], strides = [1, 1]} : vector<2x128xf32> to vector<2x32xf32>
    %301 = math.tanh %300 : vector<2x32xf32>
    %302 = vector.extract_strided_slice %299 {offsets = [0, 32], sizes = [2, 32], strides = [1, 1]} : vector<2x96xf32> to vector<2x32xf32>
    %303 = arith.mulf %302, %252 : vector<2x32xf32>
    %304 = vector.extract_strided_slice %299 {offsets = [0, 0], sizes = [2, 32], strides = [1, 1]} : vector<2x96xf32> to vector<2x32xf32>
    %305 = arith.mulf %304, %301 : vector<2x32xf32>
    %306 = arith.addf %303, %305 : vector<2x32xf32>
    %307 = vector.extract_strided_slice %299 {offsets = [0, 64], sizes = [2, 32], strides = [1, 1]} : vector<2x96xf32> to vector<2x32xf32>
    %308 = math.tanh %306 : vector<2x32xf32>
    %309 = arith.mulf %307, %308 : vector<2x32xf32>
    %310 = arith.truncf %309 : vector<2x32xf32> to vector<2x32xbf16>
    %311 = arith.index_cast %c4_i32 : i32 to index
    %c0_77 = arith.constant 0 : index
    %c0_78 = arith.constant 0 : index
    %312 = vector.load %arg19[%311, %c0_77, %c0_78] : memref<8x2x32xbf16, #tpu.memory_space<vmem>>, vector<1x2x32xbf16>
    %313 = vector.shape_cast %312 : vector<1x2x32xbf16> to vector<2x32xbf16>
    %314 = vector.shape_cast %310 : vector<2x32xbf16> to vector<1x2x32xbf16>
    tpu.vector_store %arg19[%311, %c0_77, %c0_78], %314 {strides = array<i32>} : memref<8x2x32xbf16, #tpu.memory_space<vmem>>, vector<1x2x32xbf16>,
    %315 = arith.addf %261, %309 : vector<2x32xf32>
    %316 = arith.mulf %309, %309 : vector<2x32xf32>
    %317 = arith.addf %263, %316 : vector<2x32xf32>
    %c5_i32 = arith.constant 5 : i32
    %318 = tpu.concatenate %287, %309 in 1 : vector<2x32xf32>, vector<2x32xf32> -> vector<2x64xf32>
    %319 = arith.truncf %318 : vector<2x64xf32> to vector<2x64xbf16>
    %cst_79 = arith.constant dense<0.000000e+00> : vector<2x256xf32>
    %320 = tpu.matmul %319, %38, %cst_79 {dimension_numbers = #tpu.dot_dimension_numbers<[1], [0], [0], [1], [0, 0, 1, 1], [], []>} : vector<2x64xbf16>, vector<64x256xbf16>, vector<2x256xf32> -> vector<2x256xf32>
    %321 = arith.index_cast %c5_i32 : i32 to index
    %c0_80 = arith.constant 0 : index
    %c0_81 = arith.constant 0 : index
    %322 = vector.load %arg18[%321, %c0_80, %c0_81] : memref<8x2x128xf32, #tpu.memory_space<vmem>>, vector<1x2x128xf32>
    %323 = vector.shape_cast %322 : vector<1x2x128xf32> to vector<2x128xf32>
    %324 = vector.extract_strided_slice %320 {offsets = [0, 0], sizes = [2, 128], strides = [1, 1]} : vector<2x256xf32> to vector<2x128xf32>
    %325 = arith.addf %323, %324 : vector<2x128xf32>
    %326 = vector.extract_strided_slice %325 {offsets = [0, 0], sizes = [2, 96], strides = [1, 1]} : vector<2x128xf32> to vector<2x96xf32>
    %327 = arith.negf %326 : vector<2x96xf32>
    %328 = math.exp %327 : vector<2x96xf32>
    %cst_82 = arith.constant 1.000000e+00 : f32
    %329 = vector.broadcast %cst_82 : f32 to vector<2x96xf32>
    %330 = arith.addf %329, %328 : vector<2x96xf32>
    %331 = arith.divf %329, %330 : vector<2x96xf32>
    %332 = vector.extract_strided_slice %325 {offsets = [0, 96], sizes = [2, 32], strides = [1, 1]} : vector<2x128xf32> to vector<2x32xf32>
    %333 = math.tanh %332 : vector<2x32xf32>
    %334 = vector.extract_strided_slice %331 {offsets = [0, 32], sizes = [2, 32], strides = [1, 1]} : vector<2x96xf32> to vector<2x32xf32>
    %335 = arith.mulf %334, %284 : vector<2x32xf32>
    %336 = vector.extract_strided_slice %331 {offsets = [0, 0], sizes = [2, 32], strides = [1, 1]} : vector<2x96xf32> to vector<2x32xf32>
    %337 = arith.mulf %336, %333 : vector<2x32xf32>
    %338 = arith.addf %335, %337 : vector<2x32xf32>
    %339 = vector.extract_strided_slice %331 {offsets = [0, 64], sizes = [2, 32], strides = [1, 1]} : vector<2x96xf32> to vector<2x32xf32>
    %340 = math.tanh %338 : vector<2x32xf32>
    %341 = arith.mulf %339, %340 : vector<2x32xf32>
    %342 = arith.truncf %341 : vector<2x32xf32> to vector<2x32xbf16>
    %cst_83 = arith.constant dense<0.000000e+00> : vector<2x128xf32>
    %343 = tpu.matmul %342, %32, %cst_83 {dimension_numbers = #tpu.dot_dimension_numbers<[1], [0], [0], [1], [0, 0, 1, 1], [], []>} : vector<2x32xbf16>, vector<32x128xbf16>, vector<2x128xf32> -> vector<2x128xf32>
    %344 = vector.extract_strided_slice %320 {offsets = [0, 128], sizes = [2, 128], strides = [1, 1]} : vector<2x256xf32> to vector<2x128xf32>
    %345 = arith.addf %343, %344 : vector<2x128xf32>
    %346 = vector.broadcast %34 : vector<1x128xf32> to vector<2x128xf32>
    %347 = arith.addf %345, %346 : vector<2x128xf32>
    %348 = vector.extract_strided_slice %347 {offsets = [0, 0], sizes = [2, 96], strides = [1, 1]} : vector<2x128xf32> to vector<2x96xf32>
    %349 = arith.negf %348 : vector<2x96xf32>
    %350 = math.exp %349 : vector<2x96xf32>
    %cst_84 = arith.constant 1.000000e+00 : f32
    %351 = vector.broadcast %cst_84 : f32 to vector<2x96xf32>
    %352 = arith.addf %351, %350 : vector<2x96xf32>
    %353 = arith.divf %351, %352 : vector<2x96xf32>
    %354 = vector.extract_strided_slice %347 {offsets = [0, 96], sizes = [2, 32], strides = [1, 1]} : vector<2x128xf32> to vector<2x32xf32>
    %355 = math.tanh %354 : vector<2x32xf32>
    %356 = vector.extract_strided_slice %353 {offsets = [0, 32], sizes = [2, 32], strides = [1, 1]} : vector<2x96xf32> to vector<2x32xf32>
    %357 = arith.mulf %356, %306 : vector<2x32xf32>
    %358 = vector.extract_strided_slice %353 {offsets = [0, 0], sizes = [2, 32], strides = [1, 1]} : vector<2x96xf32> to vector<2x32xf32>
    %359 = arith.mulf %358, %355 : vector<2x32xf32>
    %360 = arith.addf %357, %359 : vector<2x32xf32>
    %361 = vector.extract_strided_slice %353 {offsets = [0, 64], sizes = [2, 32], strides = [1, 1]} : vector<2x96xf32> to vector<2x32xf32>
    %362 = math.tanh %360 : vector<2x32xf32>
    %363 = arith.mulf %361, %362 : vector<2x32xf32>
    %364 = arith.truncf %363 : vector<2x32xf32> to vector<2x32xbf16>
    %365 = arith.index_cast %c5_i32 : i32 to index
    %c0_85 = arith.constant 0 : index
    %c0_86 = arith.constant 0 : index
    %366 = vector.load %arg19[%365, %c0_85, %c0_86] : memref<8x2x32xbf16, #tpu.memory_space<vmem>>, vector<1x2x32xbf16>
    %367 = vector.shape_cast %366 : vector<1x2x32xbf16> to vector<2x32xbf16>
    %368 = vector.shape_cast %364 : vector<2x32xbf16> to vector<1x2x32xbf16>
    tpu.vector_store %arg19[%365, %c0_85, %c0_86], %368 {strides = array<i32>} : memref<8x2x32xbf16, #tpu.memory_space<vmem>>, vector<1x2x32xbf16>,
    %369 = arith.addf %315, %363 : vector<2x32xf32>
    %370 = arith.mulf %363, %363 : vector<2x32xf32>
    %371 = arith.addf %317, %370 : vector<2x32xf32>
    %c6_i32 = arith.constant 6 : i32
    %372 = tpu.concatenate %341, %363 in 1 : vector<2x32xf32>, vector<2x32xf32> -> vector<2x64xf32>
    %373 = arith.truncf %372 : vector<2x64xf32> to vector<2x64xbf16>
    %cst_87 = arith.constant dense<0.000000e+00> : vector<2x256xf32>
    %374 = tpu.matmul %373, %38, %cst_87 {dimension_numbers = #tpu.dot_dimension_numbers<[1], [0], [0], [1], [0, 0, 1, 1], [], []>} : vector<2x64xbf16>, vector<64x256xbf16>, vector<2x256xf32> -> vector<2x256xf32>
    %375 = arith.index_cast %c6_i32 : i32 to index
    %c0_88 = arith.constant 0 : index
    %c0_89 = arith.constant 0 : index
    %376 = vector.load %arg18[%375, %c0_88, %c0_89] : memref<8x2x128xf32, #tpu.memory_space<vmem>>, vector<1x2x128xf32>
    %377 = vector.shape_cast %376 : vector<1x2x128xf32> to vector<2x128xf32>
    %378 = vector.extract_strided_slice %374 {offsets = [0, 0], sizes = [2, 128], strides = [1, 1]} : vector<2x256xf32> to vector<2x128xf32>
    %379 = arith.addf %377, %378 : vector<2x128xf32>
    %380 = vector.extract_strided_slice %379 {offsets = [0, 0], sizes = [2, 96], strides = [1, 1]} : vector<2x128xf32> to vector<2x96xf32>
    %381 = arith.negf %380 : vector<2x96xf32>
    %382 = math.exp %381 : vector<2x96xf32>
    %cst_90 = arith.constant 1.000000e+00 : f32
    %383 = vector.broadcast %cst_90 : f32 to vector<2x96xf32>
    %384 = arith.addf %383, %382 : vector<2x96xf32>
    %385 = arith.divf %383, %384 : vector<2x96xf32>
    %386 = vector.extract_strided_slice %379 {offsets = [0, 96], sizes = [2, 32], strides = [1, 1]} : vector<2x128xf32> to vector<2x32xf32>
    %387 = math.tanh %386 : vector<2x32xf32>
    %388 = vector.extract_strided_slice %385 {offsets = [0, 32], sizes = [2, 32], strides = [1, 1]} : vector<2x96xf32> to vector<2x32xf32>
    %389 = arith.mulf %388, %338 : vector<2x32xf32>
    %390 = vector.extract_strided_slice %385 {offsets = [0, 0], sizes = [2, 32], strides = [1, 1]} : vector<2x96xf32> to vector<2x32xf32>
    %391 = arith.mulf %390, %387 : vector<2x32xf32>
    %392 = arith.addf %389, %391 : vector<2x32xf32>
    %393 = vector.extract_strided_slice %385 {offsets = [0, 64], sizes = [2, 32], strides = [1, 1]} : vector<2x96xf32> to vector<2x32xf32>
    %394 = math.tanh %392 : vector<2x32xf32>
    %395 = arith.mulf %393, %394 : vector<2x32xf32>
    %396 = arith.truncf %395 : vector<2x32xf32> to vector<2x32xbf16>
    %cst_91 = arith.constant dense<0.000000e+00> : vector<2x128xf32>
    %397 = tpu.matmul %396, %32, %cst_91 {dimension_numbers = #tpu.dot_dimension_numbers<[1], [0], [0], [1], [0, 0, 1, 1], [], []>} : vector<2x32xbf16>, vector<32x128xbf16>, vector<2x128xf32> -> vector<2x128xf32>
    %398 = vector.extract_strided_slice %374 {offsets = [0, 128], sizes = [2, 128], strides = [1, 1]} : vector<2x256xf32> to vector<2x128xf32>
    %399 = arith.addf %397, %398 : vector<2x128xf32>
    %400 = vector.broadcast %34 : vector<1x128xf32> to vector<2x128xf32>
    %401 = arith.addf %399, %400 : vector<2x128xf32>
    %402 = vector.extract_strided_slice %401 {offsets = [0, 0], sizes = [2, 96], strides = [1, 1]} : vector<2x128xf32> to vector<2x96xf32>
    %403 = arith.negf %402 : vector<2x96xf32>
    %404 = math.exp %403 : vector<2x96xf32>
    %cst_92 = arith.constant 1.000000e+00 : f32
    %405 = vector.broadcast %cst_92 : f32 to vector<2x96xf32>
    %406 = arith.addf %405, %404 : vector<2x96xf32>
    %407 = arith.divf %405, %406 : vector<2x96xf32>
    %408 = vector.extract_strided_slice %401 {offsets = [0, 96], sizes = [2, 32], strides = [1, 1]} : vector<2x128xf32> to vector<2x32xf32>
    %409 = math.tanh %408 : vector<2x32xf32>
    %410 = vector.extract_strided_slice %407 {offsets = [0, 32], sizes = [2, 32], strides = [1, 1]} : vector<2x96xf32> to vector<2x32xf32>
    %411 = arith.mulf %410, %360 : vector<2x32xf32>
    %412 = vector.extract_strided_slice %407 {offsets = [0, 0], sizes = [2, 32], strides = [1, 1]} : vector<2x96xf32> to vector<2x32xf32>
    %413 = arith.mulf %412, %409 : vector<2x32xf32>
    %414 = arith.addf %411, %413 : vector<2x32xf32>
    %415 = vector.extract_strided_slice %407 {offsets = [0, 64], sizes = [2, 32], strides = [1, 1]} : vector<2x96xf32> to vector<2x32xf32>
    %416 = math.tanh %414 : vector<2x32xf32>
    %417 = arith.mulf %415, %416 : vector<2x32xf32>
    %418 = arith.truncf %417 : vector<2x32xf32> to vector<2x32xbf16>
    %419 = arith.index_cast %c6_i32 : i32 to index
    %c0_93 = arith.constant 0 : index
    %c0_94 = arith.constant 0 : index
    %420 = vector.load %arg19[%419, %c0_93, %c0_94] : memref<8x2x32xbf16, #tpu.memory_space<vmem>>, vector<1x2x32xbf16>
    %421 = vector.shape_cast %420 : vector<1x2x32xbf16> to vector<2x32xbf16>
    %422 = vector.shape_cast %418 : vector<2x32xbf16> to vector<1x2x32xbf16>
    tpu.vector_store %arg19[%419, %c0_93, %c0_94], %422 {strides = array<i32>} : memref<8x2x32xbf16, #tpu.memory_space<vmem>>, vector<1x2x32xbf16>,
    %423 = arith.addf %369, %417 : vector<2x32xf32>
    %424 = arith.mulf %417, %417 : vector<2x32xf32>
    %425 = arith.addf %371, %424 : vector<2x32xf32>
    %c7_i32 = arith.constant 7 : i32
    %426 = tpu.concatenate %395, %417 in 1 : vector<2x32xf32>, vector<2x32xf32> -> vector<2x64xf32>
    %427 = arith.truncf %426 : vector<2x64xf32> to vector<2x64xbf16>
    %cst_95 = arith.constant dense<0.000000e+00> : vector<2x256xf32>
    %428 = tpu.matmul %427, %38, %cst_95 {dimension_numbers = #tpu.dot_dimension_numbers<[1], [0], [0], [1], [0, 0, 1, 1], [], []>} : vector<2x64xbf16>, vector<64x256xbf16>, vector<2x256xf32> -> vector<2x256xf32>
    %429 = arith.index_cast %c7_i32 : i32 to index
    %c0_96 = arith.constant 0 : index
    %c0_97 = arith.constant 0 : index
    %430 = vector.load %arg18[%429, %c0_96, %c0_97] : memref<8x2x128xf32, #tpu.memory_space<vmem>>, vector<1x2x128xf32>
    %431 = vector.shape_cast %430 : vector<1x2x128xf32> to vector<2x128xf32>
    %432 = vector.extract_strided_slice %428 {offsets = [0, 0], sizes = [2, 128], strides = [1, 1]} : vector<2x256xf32> to vector<2x128xf32>
    %433 = arith.addf %431, %432 : vector<2x128xf32>
    %434 = vector.extract_strided_slice %433 {offsets = [0, 0], sizes = [2, 96], strides = [1, 1]} : vector<2x128xf32> to vector<2x96xf32>
    %435 = arith.negf %434 : vector<2x96xf32>
    %436 = math.exp %435 : vector<2x96xf32>
    %cst_98 = arith.constant 1.000000e+00 : f32
    %437 = vector.broadcast %cst_98 : f32 to vector<2x96xf32>
    %438 = arith.addf %437, %436 : vector<2x96xf32>
    %439 = arith.divf %437, %438 : vector<2x96xf32>
    %440 = vector.extract_strided_slice %433 {offsets = [0, 96], sizes = [2, 32], strides = [1, 1]} : vector<2x128xf32> to vector<2x32xf32>
    %441 = math.tanh %440 : vector<2x32xf32>
    %442 = vector.extract_strided_slice %439 {offsets = [0, 32], sizes = [2, 32], strides = [1, 1]} : vector<2x96xf32> to vector<2x32xf32>
    %443 = arith.mulf %442, %392 : vector<2x32xf32>
    %444 = vector.extract_strided_slice %439 {offsets = [0, 0], sizes = [2, 32], strides = [1, 1]} : vector<2x96xf32> to vector<2x32xf32>
    %445 = arith.mulf %444, %441 : vector<2x32xf32>
    %446 = arith.addf %443, %445 : vector<2x32xf32>
    %447 = vector.extract_strided_slice %439 {offsets = [0, 64], sizes = [2, 32], strides = [1, 1]} : vector<2x96xf32> to vector<2x32xf32>
    %448 = math.tanh %446 : vector<2x32xf32>
    %449 = arith.mulf %447, %448 : vector<2x32xf32>
    %450 = arith.truncf %449 : vector<2x32xf32> to vector<2x32xbf16>
    %cst_99 = arith.constant dense<0.000000e+00> : vector<2x128xf32>
    %451 = tpu.matmul %450, %32, %cst_99 {dimension_numbers = #tpu.dot_dimension_numbers<[1], [0], [0], [1], [0, 0, 1, 1], [], []>} : vector<2x32xbf16>, vector<32x128xbf16>, vector<2x128xf32> -> vector<2x128xf32>
    %452 = vector.extract_strided_slice %428 {offsets = [0, 128], sizes = [2, 128], strides = [1, 1]} : vector<2x256xf32> to vector<2x128xf32>
    %453 = arith.addf %451, %452 : vector<2x128xf32>
    %454 = vector.broadcast %34 : vector<1x128xf32> to vector<2x128xf32>
    %455 = arith.addf %453, %454 : vector<2x128xf32>
    %456 = vector.extract_strided_slice %455 {offsets = [0, 0], sizes = [2, 96], strides = [1, 1]} : vector<2x128xf32> to vector<2x96xf32>
    %457 = arith.negf %456 : vector<2x96xf32>
    %458 = math.exp %457 : vector<2x96xf32>
    %cst_100 = arith.constant 1.000000e+00 : f32
    %459 = vector.broadcast %cst_100 : f32 to vector<2x96xf32>
    %460 = arith.addf %459, %458 : vector<2x96xf32>
    %461 = arith.divf %459, %460 : vector<2x96xf32>
    %462 = vector.extract_strided_slice %455 {offsets = [0, 96], sizes = [2, 32], strides = [1, 1]} : vector<2x128xf32> to vector<2x32xf32>
    %463 = math.tanh %462 : vector<2x32xf32>
    %464 = vector.extract_strided_slice %461 {offsets = [0, 32], sizes = [2, 32], strides = [1, 1]} : vector<2x96xf32> to vector<2x32xf32>
    %465 = arith.mulf %464, %414 : vector<2x32xf32>
    %466 = vector.extract_strided_slice %461 {offsets = [0, 0], sizes = [2, 32], strides = [1, 1]} : vector<2x96xf32> to vector<2x32xf32>
    %467 = arith.mulf %466, %463 : vector<2x32xf32>
    %468 = arith.addf %465, %467 : vector<2x32xf32>
    %469 = vector.extract_strided_slice %461 {offsets = [0, 64], sizes = [2, 32], strides = [1, 1]} : vector<2x96xf32> to vector<2x32xf32>
    %470 = math.tanh %468 : vector<2x32xf32>
    %471 = arith.mulf %469, %470 : vector<2x32xf32>
    %472 = arith.truncf %471 : vector<2x32xf32> to vector<2x32xbf16>
    %473 = arith.index_cast %c7_i32 : i32 to index
    %c0_101 = arith.constant 0 : index
    %c0_102 = arith.constant 0 : index
    %474 = vector.load %arg19[%473, %c0_101, %c0_102] : memref<8x2x32xbf16, #tpu.memory_space<vmem>>, vector<1x2x32xbf16>
    %475 = vector.shape_cast %474 : vector<1x2x32xbf16> to vector<2x32xbf16>
    %476 = vector.shape_cast %472 : vector<2x32xbf16> to vector<1x2x32xbf16>
    tpu.vector_store %arg19[%473, %c0_101, %c0_102], %476 {strides = array<i32>} : memref<8x2x32xbf16, #tpu.memory_space<vmem>>, vector<1x2x32xbf16>,
    %477 = arith.addf %423, %471 : vector<2x32xf32>
    %478 = arith.mulf %471, %471 : vector<2x32xf32>
    %479 = arith.addf %425, %478 : vector<2x32xf32>
    %c8_i32 = arith.constant 8 : i32
    %c0_103 = arith.constant 0 : index
    %c0_104 = arith.constant 0 : index
    %c0_105 = arith.constant 0 : index
    %480 = vector.load %arg16[%c0_103, %c0_104, %c0_105] : memref<2x2x32xf32, #tpu.memory_space<vmem>>, vector<1x2x32xf32>
    %481 = vector.shape_cast %480 : vector<1x2x32xf32> to vector<2x32xf32>
    %482 = vector.shape_cast %449 : vector<2x32xf32> to vector<1x2x32xf32>
    tpu.vector_store %arg16[%c0_103, %c0_104, %c0_105], %482 {strides = array<i32>} : memref<2x2x32xf32, #tpu.memory_space<vmem>>, vector<1x2x32xf32>,
    %c1_106 = arith.constant 1 : index
    %c0_107 = arith.constant 0 : index
    %c0_108 = arith.constant 0 : index
    %483 = vector.load %arg16[%c1_106, %c0_107, %c0_108] : memref<2x2x32xf32, #tpu.memory_space<vmem>>, vector<1x2x32xf32>
    %484 = vector.shape_cast %483 : vector<1x2x32xf32> to vector<2x32xf32>
    %485 = vector.shape_cast %471 : vector<2x32xf32> to vector<1x2x32xf32>
    tpu.vector_store %arg16[%c1_106, %c0_107, %c0_108], %485 {strides = array<i32>} : memref<2x2x32xf32, #tpu.memory_space<vmem>>, vector<1x2x32xf32>,
    %c0_109 = arith.constant 0 : index
    %c0_110 = arith.constant 0 : index
    %c0_111 = arith.constant 0 : index
    %486 = vector.load %arg17[%c0_109, %c0_110, %c0_111] : memref<2x2x32xf32, #tpu.memory_space<vmem>>, vector<1x2x32xf32>
    %487 = vector.shape_cast %486 : vector<1x2x32xf32> to vector<2x32xf32>
    %488 = vector.shape_cast %446 : vector<2x32xf32> to vector<1x2x32xf32>
    tpu.vector_store %arg17[%c0_109, %c0_110, %c0_111], %488 {strides = array<i32>} : memref<2x2x32xf32, #tpu.memory_space<vmem>>, vector<1x2x32xf32>,
    %c1_112 = arith.constant 1 : index
    %c0_113 = arith.constant 0 : index
    %c0_114 = arith.constant 0 : index
    %489 = vector.load %arg17[%c1_112, %c0_113, %c0_114] : memref<2x2x32xf32, #tpu.memory_space<vmem>>, vector<1x2x32xf32>
    %490 = vector.shape_cast %489 : vector<1x2x32xf32> to vector<2x32xf32>
    %491 = vector.shape_cast %468 : vector<2x32xf32> to vector<1x2x32xf32>
    tpu.vector_store %arg17[%c1_112, %c0_113, %c0_114], %491 {strides = array<i32>} : memref<2x2x32xf32, #tpu.memory_space<vmem>>, vector<1x2x32xf32>,
    %cst_115 = arith.constant dense<0.000000e+00> : vector<32xf32>
    %492 = vector.multi_reduction <add>, %477, %cst_115 [0] : vector<2x32xf32> to vector<32xf32>
    %493 = vector.shape_cast %492 : vector<32xf32> to vector<1x32xf32>
    %cst_116 = arith.constant 1.600000e+01 : f32
    %494 = vector.broadcast %cst_116 : f32 to vector<1x32xf32>
    %495 = arith.divf %493, %494 : vector<1x32xf32>
    %cst_117 = arith.constant dense<0.000000e+00> : vector<32xf32>
    %496 = vector.multi_reduction <add>, %479, %cst_117 [0] : vector<2x32xf32> to vector<32xf32>
    %497 = vector.shape_cast %496 : vector<32xf32> to vector<1x32xf32>
    %cst_118 = arith.constant 1.600000e+01 : f32
    %498 = vector.broadcast %cst_118 : f32 to vector<1x32xf32>
    %499 = arith.divf %497, %498 : vector<1x32xf32>
    %500 = arith.mulf %495, %495 : vector<1x32xf32>
    %501 = arith.subf %499, %500 : vector<1x32xf32>
    %cst_119 = arith.constant 0.000000e+00 : f32
    %502 = vector.broadcast %cst_119 : f32 to vector<1x32xf32>
    %503 = arith.maximumf %501, %502 : vector<1x32xf32>
    %c0_120 = arith.constant 0 : index
    %c0_121 = arith.constant 0 : index
    %504 = vector.load %arg11[%c0_120, %c0_121] : memref<1x32xf32, #tpu.memory_space<vmem>>, vector<1x32xf32>
    %cst_122 = arith.constant 9.99999974E-6 : f32
    %505 = vector.broadcast %cst_122 : f32 to vector<1x32xf32>
    %506 = arith.addf %503, %505 : vector<1x32xf32>
    %507 = math.rsqrt %506 : vector<1x32xf32>
    %508 = arith.mulf %504, %507 : vector<1x32xf32>
    %c0_123 = arith.constant 0 : index
    %c0_124 = arith.constant 0 : index
    %509 = vector.load %arg12[%c0_123, %c0_124] : memref<1x32xf32, #tpu.memory_space<vmem>>, vector<1x32xf32>
    %510 = arith.mulf %495, %508 : vector<1x32xf32>
    %511 = arith.subf %509, %510 : vector<1x32xf32>
    %c0_125 = arith.constant 0 : index
    %c0_126 = arith.constant 0 : index
    %c0_127 = arith.constant 0 : index
    %512 = vector.load %arg19[%c0_125, %c0_126, %c0_127] : memref<8x2x32xbf16, #tpu.memory_space<vmem>>, vector<8x2x32xbf16>
    %513 = vector.shape_cast %512 : vector<8x2x32xbf16> to vector<16x32xbf16>
    %514 = arith.extf %513 : vector<16x32xbf16> to vector<16x32xf32>
    %515 = vector.broadcast %508 : vector<1x32xf32> to vector<16x32xf32>
    %516 = arith.mulf %514, %515 : vector<16x32xf32>
    %517 = vector.broadcast %511 : vector<1x32xf32> to vector<16x32xf32>
    %518 = arith.addf %516, %517 : vector<16x32xf32>
    %519 = arith.truncf %518 : vector<16x32xf32> to vector<16x32xbf16>
    %c0_128 = arith.constant 0 : index
    %c0_129 = arith.constant 0 : index
    %520 = vector.load %arg13[%c0_128, %c0_129] : memref<32x16xbf16, #tpu.memory_space<vmem>>, vector<32x16xbf16>
    %cst_130 = arith.constant dense<0.000000e+00> : vector<16x16xf32>
    %521 = tpu.matmul %519, %520, %cst_130 {dimension_numbers = #tpu.dot_dimension_numbers<[1], [0], [0], [1], [0, 0, 1, 1], [], []>} : vector<16x32xbf16>, vector<32x16xbf16>, vector<16x16xf32> -> vector<16x16xf32>
    %c0_131 = arith.constant 0 : index
    %c0_132 = arith.constant 0 : index
    %522 = vector.load %arg14[%c0_131, %c0_132] : memref<1x16xf32, #tpu.memory_space<vmem>>, vector<1x16xf32>
    %523 = vector.broadcast %522 : vector<1x16xf32> to vector<16x16xf32>
    %524 = arith.addf %521, %523 : vector<16x16xf32>
    %525 = arith.addf %524, %1 : vector<16x16xf32>
    %526 = vector.shape_cast %525 : vector<16x16xf32> to vector<8x2x16xf32>
    %c0_133 = arith.constant 0 : index
    %c0_134 = arith.constant 0 : index
    %c0_135 = arith.constant 0 : index
    %527 = vector.load %arg15[%c0_133, %c0_134, %c0_135] : memref<8x2x16xf32, #tpu.memory_space<vmem>>, vector<8x2x16xf32>
    tpu.vector_store %arg15[%c0_133, %c0_134, %c0_135], %526 {strides = array<i32>} : memref<8x2x16xf32, #tpu.memory_space<vmem>>, vector<8x2x16xf32>,
    return
  }
}

</mosaic_0001>

<llo_original>
// kernel: _rnn_forward_impl.1
$region0: #{_rnn_forward_impl.1}
  #allocation0 [shape = 'u32[]', space=smem, size = 0x4, offset = 0x4, fixed_abs, tag = 'smem constant byte address 0x4 - core index']
  #allocation1 [shape = 'u32[72,128]{1,0:T(1,128)}', space=vmem, size = 0x9000, scoped, tag = 'internal scratch']
  #allocation2 [shape = 'f32[8,2,128]{2,1,0:T(2,128)}', space=vmem, size = 0x2000, scoped, tag = 'scratch operand']
  #allocation3 [shape = 'bf16[8,2,32]{2,1,0:T(2,128)(2,1)}', space=vmem, size = 0x1000, scoped, tag = 'scratch operand']
  %s0 = inlined_call_operand.vmem [shape: f32[8,2,16], index: 0, kind: input, shape index: {}]
  %s1 = inlined_call_operand.vmem [shape: f32[2,2,32], index: 1, kind: input, shape index: {}]
  %s2 = inlined_call_operand.vmem [shape: f32[2,2,32], index: 2, kind: input, shape index: {}]
  %s3 = inlined_call_operand.vmem [shape: f32[1,16], index: 3, kind: input, shape index: {}]
  %s4 = inlined_call_operand.vmem [shape: f32[1,16], index: 4, kind: input, shape index: {}]
  %s5 = inlined_call_operand.vmem [shape: bf16[16,128], index: 5, kind: input, shape index: {}]
  %s6 = inlined_call_operand.vmem [shape: bf16[32,128], index: 6, kind: input, shape index: {}]
  %s7 = inlined_call_operand.vmem [shape: f32[1,128], index: 7, kind: input, shape index: {}]
  %s8 = inlined_call_operand.vmem [shape: bf16[32,128], index: 8, kind: input, shape index: {}]
  %s9 = inlined_call_operand.vmem [shape: bf16[32,128], index: 9, kind: input, shape index: {}]
  %s10 = inlined_call_operand.vmem [shape: f32[1,128], index: 10, kind: input, shape index: {}]
  %s11 = inlined_call_operand.vmem [shape: f32[1,32], index: 11, kind: input, shape index: {}]
  %s12 = inlined_call_operand.vmem [shape: f32[1,32], index: 12, kind: input, shape index: {}]
  %s13 = inlined_call_operand.vmem [shape: bf16[32,16], index: 13, kind: input, shape index: {}]
  %s14 = inlined_call_operand.vmem [shape: f32[1,16], index: 14, kind: input, shape index: {}]
  %s15 = inlined_call_operand.vmem [shape: f32[8,2,16], index: 15, kind: output, shape index: {0}]
  %s16 = inlined_call_operand.hbm [shape: f32[2,2,32], index: 16, kind: output, shape index: {1}]
  %s17 = inlined_call_operand.hbm [shape: f32[2,2,32], index: 17, kind: output, shape index: {2}]
  %18 = xla_tuple %s15, %s16, %s17
  %s19 = sld [smem:[#allocation0]]
  $region86: #{_rnn_forward_impl.1} parent=0
    _
  %s21 = ssub.s32 1, %s19
  %s22 = scalar_select 0, %s21, %s19
  $region1: #{_rnn_forward_impl.1} parent=0
    #allocation4 [shape = 'u8[2048]{0}', space=vmem, size = 0x800, scoped, tag = 'output window, operand 1, single buffered']
    #allocation5 [shape = 's32[1]{0}', space=sflag, size = 0x4, scoped, tag = 'scoped memory for _rnn_forward_impl.1']
    #allocation6 [shape = 'u8[2048]{0}', space=vmem, size = 0x800, scoped, tag = 'output window, operand 2, single buffered']
    #allocation7 [shape = 's32[1]{0}', space=sflag, size = 0x4, scoped, tag = 'scoped memory for _rnn_forward_impl.1']
    %23 = vsyncpa [#allocation5], 0
    %24 = vsyncpa [#allocation7], 0
    // Predicated region
    $region2: #{_rnn_forward_impl.1} parent=1 // pred_check
      _
    $region3: #{_rnn_forward_impl.1} parent=1 // pred_check_branch
      %26 = sbr.rel (0) target = $region5
    $region4: #{_rnn_forward_impl.1} parent=1 // pred_region
      _
    $region5: #{_rnn_forward_impl.1} parent=1 // pred_fallthru
      _
    // Predicated region
    $region6: #{_rnn_forward_impl.1} parent=1 // pred_check
      _
    $region7: #{_rnn_forward_impl.1} parent=1 // pred_check_branch
      %28 = sbr.rel (0) target = $region9
    $region8: #{_rnn_forward_impl.1} parent=1 // pred_region
      _
    $region9: #{_rnn_forward_impl.1} parent=1 // pred_fallthru
      _
    // Predicated region
    $region10: #{_rnn_forward_impl.1} parent=1 // pred_check
      _
    $region11: #{_rnn_forward_impl.1} parent=1 // pred_check_branch
      %30 = sbr.rel (0) target = $region13
    $region12: #{_rnn_forward_impl.1} parent=1 // pred_region
      _
    $region13: #{_rnn_forward_impl.1} parent=1 // pred_fallthru
      _
    // Predicated region
    $region14: #{_rnn_forward_impl.1} parent=1 // pred_check
      _
    $region15: #{_rnn_forward_impl.1} parent=1 // pred_check_branch
      %32 = sbr.rel (0) target = $region17
    $region16: #{_rnn_forward_impl.1} parent=1 // pred_region
      _
    $region17: #{_rnn_forward_impl.1} parent=1 // pred_fallthru
      _
    // Predicated region
    $region18: #{_rnn_forward_impl.1} parent=1 // pred_check
      _
    $region19: #{_rnn_forward_impl.1} parent=1 // pred_check_branch
      %34 = sbr.rel (0) target = $region21
    $region20: #{_rnn_forward_impl.1} parent=1 // pred_region
      _
    $region21: #{_rnn_forward_impl.1} parent=1 // pred_fallthru
      _
    // Predicated region
    $region22: #{_rnn_forward_impl.1} parent=1 // pred_check
      _
    $region23: #{_rnn_forward_impl.1} parent=1 // pred_check_branch
      %36 = sbr.rel (0) target = $region25
    $region24: #{_rnn_forward_impl.1} parent=1 // pred_region
      _
    $region25: #{_rnn_forward_impl.1} parent=1 // pred_fallthru
      _
    // Predicated region
    $region26: #{_rnn_forward_impl.1} parent=1 // pred_check
      _
    $region27: #{_rnn_forward_impl.1} parent=1 // pred_check_branch
      %38 = sbr.rel (0) target = $region29
    $region28: #{_rnn_forward_impl.1} parent=1 // pred_region
      _
    $region29: #{_rnn_forward_impl.1} parent=1 // pred_fallthru
      _
    // Predicated region
    $region30: #{_rnn_forward_impl.1} parent=1 // pred_check
      _
    $region31: #{_rnn_forward_impl.1} parent=1 // pred_check_branch
      %40 = sbr.rel (0) target = $region33
    $region32: #{_rnn_forward_impl.1} parent=1 // pred_region
      _
    $region33: #{_rnn_forward_impl.1} parent=1 // pred_fallthru
      _
    // Predicated region
    $region34: #{_rnn_forward_impl.1} parent=1 // pred_check
      _
    $region35: #{_rnn_forward_impl.1} parent=1 // pred_check_branch
      %42 = sbr.rel (0) target = $region37
    $region36: #{_rnn_forward_impl.1} parent=1 // pred_region
      _
    $region37: #{_rnn_forward_impl.1} parent=1 // pred_fallthru
      _
    // Predicated region
    $region38: #{_rnn_forward_impl.1} parent=1 // pred_check
      _
    $region39: #{_rnn_forward_impl.1} parent=1 // pred_check_branch
      %44 = sbr.rel (0) target = $region41
    $region40: #{_rnn_forward_impl.1} parent=1 // pred_region
      _
    $region41: #{_rnn_forward_impl.1} parent=1 // pred_fallthru
      _
    // Predicated region
    $region42: #{_rnn_forward_impl.1} parent=1 // pred_check
      _
    $region43: #{_rnn_forward_impl.1} parent=1 // pred_check_branch
      %46 = sbr.rel (0) target = $region45
    $region44: #{_rnn_forward_impl.1} parent=1 // pred_region
      _
    $region45: #{_rnn_forward_impl.1} parent=1 // pred_fallthru
      _
    // Predicated region
    $region46: #{_rnn_forward_impl.1} parent=1 // pred_check
      _
    $region47: #{_rnn_forward_impl.1} parent=1 // pred_check_branch
      %48 = sbr.rel (0) target = $region49
    $region48: #{_rnn_forward_impl.1} parent=1 // pred_region
      _
    $region49: #{_rnn_forward_impl.1} parent=1 // pred_fallthru
      _
    // Predicated region
    $region50: #{_rnn_forward_impl.1} parent=1 // pred_check
      _
    $region51: #{_rnn_forward_impl.1} parent=1 // pred_check_branch
      %50 = sbr.rel (0) target = $region53
    $region52: #{_rnn_forward_impl.1} parent=1 // pred_region
      _
    $region53: #{_rnn_forward_impl.1} parent=1 // pred_fallthru
      _
    // Predicated region
    $region54: #{_rnn_forward_impl.1} parent=1 // pred_check
      _
    $region55: #{_rnn_forward_impl.1} parent=1 // pred_check_branch
      %52 = sbr.rel (0) target = $region57
    $region56: #{_rnn_forward_impl.1} parent=1 // pred_region
      _
    $region57: #{_rnn_forward_impl.1} parent=1 // pred_fallthru
      _
    // Predicated region
    $region58: #{_rnn_forward_impl.1} parent=1 // pred_check
      _
    $region59: #{_rnn_forward_impl.1} parent=1 // pred_check_branch
      %54 = sbr.rel (0) target = $region61
    $region60: #{_rnn_forward_impl.1} parent=1 // pred_region
      _
    $region61: #{_rnn_forward_impl.1} parent=1 // pred_fallthru
      _
    %v56 = vld [vmem:[%s0] sm:$0x3]
    %v57 = vld [vmem:[%s0 + $0x2] sm:$0x3]
    %v58 = vld [vmem:[%s0 + $0x4] sm:$0x3]
    %v59 = vld [vmem:[%s0 + $0x6] sm:$0x3]
    %v60 = vld [vmem:[%s0 + $0x8] sm:$0x3]
    %v61 = vld [vmem:[%s0 + $0xa] sm:$0x3]
    %v62 = vld [vmem:[%s0 + $0xc] sm:$0x3]
    %v63 = vld [vmem:[%s0 + $0xe] sm:$0x3]
    %72 = vst [vmem:[#allocation1] ss:$4 sm:$0xff] %v56
    %s73 = scalar_lea.vmem [#allocation1], 1
    %74 = vst [vmem:[%s73] ss:$4 sm:$0xff] %v57
    %s75 = scalar_lea.vmem [#allocation1], 2
    %76 = vst [vmem:[%s75] ss:$4 sm:$0xff] %v58
    %s77 = scalar_lea.vmem [#allocation1], 3
    %78 = vst [vmem:[%s77] ss:$4 sm:$0xff] %v59
    %s79 = scalar_lea.vmem [#allocation1], 32
    %80 = vst [vmem:[%s79] ss:$4 sm:$0xff] %v60
    %s81 = scalar_lea.vmem [#allocation1], 33
    %82 = vst [vmem:[%s81] ss:$4 sm:$0xff] %v61
    %s83 = scalar_lea.vmem [#allocation1], 34
    %84 = vst [vmem:[%s83] ss:$4 sm:$0xff] %v62
    %s85 = scalar_lea.vmem [#allocation1], 35
    %86 = vst [vmem:[%s85] ss:$4 sm:$0xff] %v63
    %v87 = vld.sshfl [vmem:[#allocation1] sm:$0xff pattern:$0x73625140]
    %v88 = vld.sshfl [vmem:[#allocation1 + $0x20] sm:$0xff pattern:$0x73625140]
    %vm91 = vcmask 130048
    %v92 = vsel %vm91, %v87, 0.0
    %v93 = vsel %vm91, %v88, 0.0
    %v94 = vadd.f32 %v92, %v93
    %v95 = vrot.slane %v94, 4
    %v96 = vadd.f32 %v94, %v95
    %v97 = vrot.slane %v96, 2
    %v98 = vadd.f32 %v96, %v97
    %v99 = vrot.slane %v98, 1
    %v100 = vadd.f32 %v98, %v99
    %v101 = vrcp.pop 16.0
    %v102 = vmul.f32 16.0, %v101
    %v103 = vsub.f32 1.0, %v102
    %v104 = vmul.f32 %v101, %v103
    %v105 = vadd.f32 %v101, %v104
    %vm106 = vweird.f32 %v101
    %v107 = vsel %vm106, %v101, %v105
    %v108 = vmul.f32 %v100, %v107
    %v110 = vrot.slane %v108, 2
    %v111 = vrot.slane %v108, 4
    %v112 = vrot.slane %v108, 6
    %v116 = vsub.f32 %v56, %v108
    %v117 = vsub.f32 %v57, %v110
    %v118 = vsub.f32 %v58, %v111
    %v119 = vsub.f32 %v59, %v112
    %v120 = vsub.f32 %v60, %v108
    %v121 = vsub.f32 %v61, %v110
    %v122 = vsub.f32 %v62, %v111
    %v123 = vsub.f32 %v63, %v112
    %v124 = vmul.f32 %v116, %v116
    %v125 = vmul.f32 %v117, %v117
    %v126 = vmul.f32 %v118, %v118
    %v127 = vmul.f32 %v119, %v119
    %v128 = vmul.f32 %v120, %v120
    %v129 = vmul.f32 %v121, %v121
    %v130 = vmul.f32 %v122, %v122
    %v131 = vmul.f32 %v123, %v123
    %140 = vst [vmem:[#allocation1] ss:$4 sm:$0xff] %v124
    %s141 = scalar_lea.vmem [#allocation1], 1
    %142 = vst [vmem:[%s141] ss:$4 sm:$0xff] %v125
    %s143 = scalar_lea.vmem [#allocation1], 2
    %144 = vst [vmem:[%s143] ss:$4 sm:$0xff] %v126
    %s145 = scalar_lea.vmem [#allocation1], 3
    %146 = vst [vmem:[%s145] ss:$4 sm:$0xff] %v127
    %s147 = scalar_lea.vmem [#allocation1], 32
    %148 = vst [vmem:[%s147] ss:$4 sm:$0xff] %v128
    %s149 = scalar_lea.vmem [#allocation1], 33
    %150 = vst [vmem:[%s149] ss:$4 sm:$0xff] %v129
    %s151 = scalar_lea.vmem [#allocation1], 34
    %152 = vst [vmem:[%s151] ss:$4 sm:$0xff] %v130
    %s153 = scalar_lea.vmem [#allocation1], 35
    %154 = vst [vmem:[%s153] ss:$4 sm:$0xff] %v131
    %v155 = vld.sshfl [vmem:[#allocation1] sm:$0xff pattern:$0x73625140]
    %v156 = vld.sshfl [vmem:[#allocation1 + $0x20] sm:$0xff pattern:$0x73625140]
    %v159 = vsel %vm91, %v155, 0.0
    %v160 = vsel %vm91, %v156, 0.0
    %v161 = vadd.f32 %v159, %v160
    %v162 = vrot.slane %v161, 4
    %v163 = vadd.f32 %v161, %v162
    %v164 = vrot.slane %v163, 2
    %v165 = vadd.f32 %v163, %v164
    %v166 = vrot.slane %v165, 1
    %v167 = vadd.f32 %v165, %v166
    %v168 = vmul.f32 %v167, %v107
    %v169 = vld [vmem:[%s3] sm:$0x1]
    %v170 = vadd.f32 %v168, 1e-05
    %v171 = vrsqrt.pop %v170
    %v172 = vmul.f32 %v171, %v170
    %v173 = vmul.f32 %v172, %v171
    %v174 = vmul.f32 0.5, %v173
    %v175 = vsub.f32 1.5, %v174
    %v176 = vmul.f32 %v171, %v175
    %vm177 = vweird.f32 %v170
    %vm178 = vweird.f32 %v171
    %vm179 = vmor %vm177, %vm178
    %v180 = vsel %vm179, %v171, %v176
    %v181 = vmul.f32 %v169, %v180
    %v183 = vperm.slane %v181, 0
    %v185 = vrot.slane %v183, 2
    %v186 = vrot.slane %v183, 4
    %v187 = vrot.slane %v183, 6
    %v191 = vmul.f32 %v116, %v183
    %v192 = vmul.f32 %v117, %v185
    %v193 = vmul.f32 %v118, %v186
    %v194 = vmul.f32 %v119, %v187
    %v195 = vmul.f32 %v120, %v183
    %v196 = vmul.f32 %v121, %v185
    %v197 = vmul.f32 %v122, %v186
    %v198 = vmul.f32 %v123, %v187
    %v199 = vld [vmem:[%s4] sm:$0x1]
    %v201 = vperm.slane %v199, 0
    %v203 = vrot.slane %v201, 2
    %v204 = vrot.slane %v201, 4
    %v205 = vrot.slane %v201, 6
    %v209 = vadd.f32 %v191, %v201
    %v210 = vadd.f32 %v192, %v203
    %v211 = vadd.f32 %v193, %v204
    %v212 = vadd.f32 %v194, %v205
    %v213 = vadd.f32 %v195, %v201
    %v214 = vadd.f32 %v196, %v203
    %v215 = vadd.f32 %v197, %v204
    %v216 = vadd.f32 %v198, %v205
    %225 = vst [vmem:[#allocation1] ss:$4 sm:$0xff] %v209
    %s226 = scalar_lea.vmem [#allocation1], 1
    %227 = vst [vmem:[%s226] ss:$4 sm:$0xff] %v210
    %s228 = scalar_lea.vmem [#allocation1], 2
    %229 = vst [vmem:[%s228] ss:$4 sm:$0xff] %v211
    %s230 = scalar_lea.vmem [#allocation1], 3
    %231 = vst [vmem:[%s230] ss:$4 sm:$0xff] %v212
    %s232 = scalar_lea.vmem [#allocation1], 32
    %233 = vst [vmem:[%s232] ss:$4 sm:$0xff] %v213
    %s234 = scalar_lea.vmem [#allocation1], 33
    %235 = vst [vmem:[%s234] ss:$4 sm:$0xff] %v214
    %s236 = scalar_lea.vmem [#allocation1], 34
    %237 = vst [vmem:[%s236] ss:$4 sm:$0xff] %v215
    %s238 = scalar_lea.vmem [#allocation1], 35
    %239 = vst [vmem:[%s238] ss:$4 sm:$0xff] %v216
    %v240 = vld.sshfl [vmem:[#allocation1] sm:$0xff pattern:$0x73625140]
    %v241 = vld.sshfl [vmem:[#allocation1 + $0x20] sm:$0xff pattern:$0x73625140]
    %v244 = vpack.c.bf16 %v241, %v240
    %v245 = vld [vmem:[%s5] sm:$0xf]
    %v246 = vld [vmem:[%s5 + $0x4] sm:$0xf]
    %v247 = vld [vmem:[%s7] sm:$0x1]
    %v249 = vperm.slane %v247, 0
    %v253 = vunpack.c.l.b16 %v245
    %v254 = vunpack.c.l.b16 %v246
    %v255 = vpack.c.b16 %v254, %v253
    %v258 = vsel %vm91, %v244, 0
    %260 = vmatpush.bf16.msra.mxu0 0
    %261 = vmatpush.bf16.msra.mxu0 0
    %262 = vmatpush.bf16.msra.mxu0 0
    %263 = vmatpush.bf16.msra.mxu0 0
    %264 = vmatpush.bf16.msra.mxu0 0
    %265 = vmatpush.bf16.msra.mxu0 0
    %266 = vmatpush.bf16.msra.mxu0 0
    %267 = vmatpush.bf16.msra.mxu0 %v255
    %268 = vmatmul.bf16.gmra.mxu0 %v258
    %v269 = vpop.f32.mrf.mxu0
    %v270 = vadd.f32 %v249, %v269
    %v271 = vpop.f32.mrf.mxu0
    %v272 = vadd.f32 %v249, %v271
    %273 = vdwg.mxu0
    %v276 = vrot.slane %v270, 2
    %v277 = vrot.slane %v270, 4
    %v278 = vrot.slane %v270, 6
    %v279 = vrot.slane %v272, 2
    %v280 = vrot.slane %v272, 4
    %v281 = vrot.slane %v272, 6
    %288 = vst [vmem:[#allocation2] sm:$0x3] %v270
    %289 = vst [vmem:[#allocation2 + $0x2] sm:$0x3] %v276
    %290 = vst [vmem:[#allocation2 + $0x4] sm:$0x3] %v277
    %291 = vst [vmem:[#allocation2 + $0x6] sm:$0x3] %v278
    %292 = vst [vmem:[#allocation2 + $0x8] sm:$0x3] %v272
    %293 = vst [vmem:[#allocation2 + $0xa] sm:$0x3] %v279
    %294 = vst [vmem:[#allocation2 + $0xc] sm:$0x3] %v280
    %295 = vst [vmem:[#allocation2 + $0xe] sm:$0x3] %v281
    %v296 = vld [vmem:[%s6] sm:$0xf]
    %v297 = vld [vmem:[%s6 + $0x4] sm:$0xf]
    %v298 = vld [vmem:[%s6 + $0x8] sm:$0xf]
    %v299 = vld [vmem:[%s6 + $0xc] sm:$0xf]
    %v300 = vld [vmem:[%s8] sm:$0xf]
    %v301 = vld [vmem:[%s8 + $0x4] sm:$0xf]
    %v302 = vld [vmem:[%s8 + $0x8] sm:$0xf]
    %v303 = vld [vmem:[%s8 + $0xc] sm:$0xf]
    %v304 = vld [vmem:[%s9] sm:$0xf]
    %v305 = vld [vmem:[%s9 + $0x4] sm:$0xf]
    %v306 = vld [vmem:[%s9 + $0x8] sm:$0xf]
    %v307 = vld [vmem:[%s9 + $0xc] sm:$0xf]
    %v308 = vld [vmem:[%s10] sm:$0x1]
    %v313 = vunpack.c.l.b16 %v296
    %v314 = vunpack.c.l.b16 %v297
    %v315 = vunpack.c.l.b16 %v298
    %v316 = vunpack.c.l.b16 %v299
    %v317 = vpack.c.b16 %v314, %v313
    %v318 = vpack.c.b16 %v316, %v315
    %v325 = vunpack.c.l.b16 %v304
    %v326 = vunpack.c.l.b16 %v305
    %v327 = vunpack.c.l.b16 %v306
    %v328 = vunpack.c.l.b16 %v307
    %v329 = vpack.c.b16 %v326, %v325
    %v330 = vpack.c.b16 %v328, %v327
    %v333 = vld [vmem:[%s1] sm:$0x3]
    %v334 = vld [vmem:[%s2] sm:$0x3]
    %s335 = scalar_lea.vmem %s1, 2
    %v336 = vld [vmem:[%s335] sm:$0x3]
    %s337 = scalar_lea.vmem %s2, 2
    %v338 = vld [vmem:[%s337] sm:$0x3]
    %340 = vrot.lane.b32.xlu0 %v336, 32
    %v341 = vpop.permute.xlu0 %340
    %vm343 = vcmask 261120
    %v344 = vsel %vm343, %v333, %v341
    %v345 = vpack.c.bf16 %v344, %v344
    %vm346 = vcmask 523264
    %v348 = vsel %vm346, %v345, 0
    %350 = vmatpush.bf16.msra.mxu0 0
    %351 = vmatpush.bf16.msra.mxu0 0
    %352 = vmatpush.bf16.msra.mxu0 0
    %353 = vmatpush.bf16.msra.mxu0 0
    %354 = vmatpush.bf16.msra.mxu0 0
    %355 = vmatpush.bf16.msra.mxu0 0
    %356 = vmatpush.bf16.msra.mxu0 %v318
    %357 = vmatpush.bf16.msra.mxu0 %v317
    %358 = vmatmul.bf16.gmra.mxu0 %v348
    %v359 = vpop.f32.mrf.mxu0
    %v360 = vadd.f32 0.0, %v359
    %v361 = vpop.f32.mrf.mxu0
    %362 = vdwg.mxu0
    %363 = vmatpush.bf16.msra.mxu0 0
    %364 = vmatpush.bf16.msra.mxu0 0
    %365 = vmatpush.bf16.msra.mxu0 0
    %366 = vmatpush.bf16.msra.mxu0 0
    %367 = vmatpush.bf16.msra.mxu0 %v330
    %368 = vmatpush.bf16.msra.mxu0 %v329
    %369 = vmatpush.bf16.msra.mxu0 0
    %370 = vmatpush.bf16.msra.mxu0 0
    %371 = vmatmul.bf16.gmra.mxu0 %v348
    %v372 = vpop.f32.mrf.mxu0
    %v373 = vadd.f32 0.0, %v372
    %v374 = vpop.f32.mrf.mxu0
    %375 = vdwg.mxu0
    %v376 = vld [vmem:[#allocation2] sm:$0x3]
    %v377 = vadd.f32 %v376, %v360
    %v378 = vxor.u32 %v377, 2147483648
    %v379 = vmul.f32 %v378, 1.442695
    %v380 = vpow.pop %v379
    %v381 = vadd.f32 %v380, 1.0
    %v382 = vrcp.pop %v381
    %v383 = vmul.f32 %v381, %v382
    %v384 = vsub.f32 1.0, %v383
    %v385 = vmul.f32 %v382, %v384
    %v386 = vadd.f32 %v382, %v385
    %vm387 = vweird.f32 %v381
    %vm388 = vweird.f32 %v382
    %vm389 = vmor %vm387, %vm388
    %v390 = vsel %vm389, %v382, %v386
    %v391 = vand.u32 2147483647, %v381
    %vm392 = vcmp.eq.f32.partialorder %v391, 8.507059e+37
    %v393 = vand.u32 %v381, 2147483648
    %v394 = vor.u32 1.1754944e-38, %v393
    %v395 = vsel %vm392, %v394, %v390
    %v396 = vmul.f32 1.0, %v395
    %v397 = vtanh.pop %v377
    %399 = vrot.lane.b32.xlu0 %v334, 32
    %v400 = vpop.permute.xlu0 %399
    %v402 = vmul.f32 %v396, %v400
    %404 = vrot.lane.b32.xlu0 %v397, 32
    %v405 = vpop.permute.xlu0 %404
    %v407 = vmul.f32 %v396, %v405
    %409 = vrot.lane.b32.xlu0 %v407, 32
    %v410 = vpop.permute.xlu0 %409
    %v412 = vadd.f32 %v402, %v410
    %v413 = vtanh.pop %v412
    %415 = vrot.lane.b32.xlu0 %v413, 32
    %v416 = vpop.permute.xlu0 %415
    %v418 = vmul.f32 %v396, %v416
    %v419 = vpack.c.bf16 %v418, %v418
    %421 = vrot.lane.b32.xlu0 %v419, 64
    %v422 = vpop.permute.xlu0 %421
    %v427 = vunpack.c.l.b16 %v300
    %v428 = vunpack.c.l.b16 %v301
    %v429 = vunpack.c.l.b16 %v302
    %v430 = vunpack.c.l.b16 %v303
    %v431 = vpack.c.b16 %v428, %v427
    %v432 = vpack.c.b16 %v430, %v429
    %v436 = vsel %vm343, %v422, 0
    %438 = vmatpush.bf16.msra.mxu0 0
    %439 = vmatpush.bf16.msra.mxu0 0
    %440 = vmatpush.bf16.msra.mxu0 0
    %441 = vmatpush.bf16.msra.mxu0 0
    %442 = vmatpush.bf16.msra.mxu0 0
    %443 = vmatpush.bf16.msra.mxu0 0
    %444 = vmatpush.bf16.msra.mxu0 %v432
    %445 = vmatpush.bf16.msra.mxu0 %v431
    %446 = vmatmul.bf16.gmra.mxu0 %v436
    %v447 = vpop.f32.mrf.mxu0
    %v448 = vadd.f32 %v373, %v447
    %v449 = vpop.f32.mrf.mxu0
    %450 = vdwg.mxu0
    %v452 = vperm.slane %v308, 0
    %v454 = vadd.f32 %v448, %v452
    %v455 = vxor.u32 %v454, 2147483648
    %v456 = vmul.f32 %v455, 1.442695
    %v457 = vpow.pop %v456
    %v458 = vadd.f32 %v457, 1.0
    %v459 = vrcp.pop %v458
    %v460 = vmul.f32 %v458, %v459
    %v461 = vsub.f32 1.0, %v460
    %v462 = vmul.f32 %v459, %v461
    %v463 = vadd.f32 %v459, %v462
    %vm464 = vweird.f32 %v458
    %vm465 = vweird.f32 %v459
    %vm466 = vmor %vm464, %vm465
    %v467 = vsel %vm466, %v459, %v463
    %v468 = vand.u32 2147483647, %v458
    %vm469 = vcmp.eq.f32.partialorder %v468, 8.507059e+37
    %v470 = vand.u32 %v458, 2147483648
    %v471 = vor.u32 1.1754944e-38, %v470
    %v472 = vsel %vm469, %v471, %v467
    %v473 = vmul.f32 1.0, %v472
    %v474 = vtanh.pop %v454
    %476 = vrot.lane.b32.xlu0 %v338, 32
    %v477 = vpop.permute.xlu0 %476
    %v479 = vmul.f32 %v473, %v477
    %481 = vrot.lane.b32.xlu0 %v474, 32
    %v482 = vpop.permute.xlu0 %481
    %v484 = vmul.f32 %v473, %v482
    %486 = vrot.lane.b32.xlu0 %v484, 32
    %v487 = vpop.permute.xlu0 %486
    %v489 = vadd.f32 %v479, %v487
    %v490 = vtanh.pop %v489
    %492 = vrot.lane.b32.xlu0 %v490, 32
    %v493 = vpop.permute.xlu0 %492
    %v495 = vmul.f32 %v473, %v493
    %v496 = vpack.c.bf16 %v495, %v495
    %v498 = vrot.slane %v496, 3
    %vm499 = vcmask 1040384
    %v502 = vsel %vm499, %v496, %v498
    %504 = vrot.lane.b32.xlu0 %v502, 64
    %v505 = vpop.permute.xlu0 %504
    %vm507 = vcmask 253952
    %508 = vst.msk [vmem:[#allocation3] sm:$0x1] %vm507, %v505
    %v509 = vadd.f32 %v495, 0.0
    %v510 = vmul.f32 %v495, %v495
    %v511 = vadd.f32 %v510, 0.0
    %513 = vrot.lane.b32.xlu0 %v418, 64
    %v514 = vpop.permute.xlu0 %513
    %517 = vrot.lane.b32.xlu0 %v495, 96
    %v518 = vpop.permute.xlu0 %517
    %v520 = vsel %vm343, %v514, %v518
    %v521 = vpack.c.bf16 %v520, %v520
    %v523 = vsel %vm346, %v521, 0
    %525 = vmatpush.bf16.msra.mxu0 0
    %526 = vmatpush.bf16.msra.mxu0 0
    %527 = vmatpush.bf16.msra.mxu0 0
    %528 = vmatpush.bf16.msra.mxu0 0
    %529 = vmatpush.bf16.msra.mxu0 0
    %530 = vmatpush.bf16.msra.mxu0 0
    %531 = vmatpush.bf16.msra.mxu0 %v318
    %532 = vmatpush.bf16.msra.mxu0 %v317
    %533 = vmatmul.bf16.gmra.mxu0 %v523
    %v534 = vpop.f32.mrf.mxu0
    %v535 = vadd.f32 0.0, %v534
    %v536 = vpop.f32.mrf.mxu0
    %537 = vdwg.mxu0
    %538 = vmatpush.bf16.msra.mxu0 0
    %539 = vmatpush.bf16.msra.mxu0 0
    %540 = vmatpush.bf16.msra.mxu0 0
    %541 = vmatpush.bf16.msra.mxu0 0
    %542 = vmatpush.bf16.msra.mxu0 %v330
    %543 = vmatpush.bf16.msra.mxu0 %v329
    %544 = vmatpush.bf16.msra.mxu0 0
    %545 = vmatpush.bf16.msra.mxu0 0
    %546 = vmatmul.bf16.gmra.mxu0 %v523
    %v547 = vpop.f32.mrf.mxu0
    %v548 = vadd.f32 0.0, %v547
    %v549 = vpop.f32.mrf.mxu0
    %550 = vdwg.mxu0
    %s551 = scalar_lea.vmem [#allocation2], 2
    %v552 = vld [vmem:[%s551] sm:$0x3]
    %v553 = vadd.f32 %v552, %v535
    %v554 = vxor.u32 %v553, 2147483648
    %v555 = vmul.f32 %v554, 1.442695
    %v556 = vpow.pop %v555
    %v557 = vadd.f32 %v556, 1.0
    %v558 = vrcp.pop %v557
    %v559 = vmul.f32 %v557, %v558
    %v560 = vsub.f32 1.0, %v559
    %v561 = vmul.f32 %v558, %v560
    %v562 = vadd.f32 %v558, %v561
    %vm563 = vweird.f32 %v557
    %vm564 = vweird.f32 %v558
    %vm565 = vmor %vm563, %vm564
    %v566 = vsel %vm565, %v558, %v562
    %v567 = vand.u32 2147483647, %v557
    %vm568 = vcmp.eq.f32.partialorder %v567, 8.507059e+37
    %v569 = vand.u32 %v557, 2147483648
    %v570 = vor.u32 1.1754944e-38, %v569
    %v571 = vsel %vm568, %v570, %v566
    %v572 = vmul.f32 1.0, %v571
    %v573 = vtanh.pop %v553
    %v574 = vmul.f32 %v572, %v412
    %576 = vrot.lane.b32.xlu0 %v573, 32
    %v577 = vpop.permute.xlu0 %576
    %v579 = vmul.f32 %v572, %v577
    %581 = vrot.lane.b32.xlu0 %v579, 32
    %v582 = vpop.permute.xlu0 %581
    %v584 = vadd.f32 %v574, %v582
    %v585 = vtanh.pop %v584
    %587 = vrot.lane.b32.xlu0 %v585, 32
    %v588 = vpop.permute.xlu0 %587
    %v590 = vmul.f32 %v572, %v588
    %v591 = vpack.c.bf16 %v590, %v590
    %593 = vrot.lane.b32.xlu0 %v591, 64
    %v594 = vpop.permute.xlu0 %593
    %v596 = vsel %vm343, %v594, 0
    %598 = vmatpush.bf16.msra.mxu0 0
    %599 = vmatpush.bf16.msra.mxu0 0
    %600 = vmatpush.bf16.msra.mxu0 0
    %601 = vmatpush.bf16.msra.mxu0 0
    %602 = vmatpush.bf16.msra.mxu0 0
    %603 = vmatpush.bf16.msra.mxu0 0
    %604 = vmatpush.bf16.msra.mxu0 %v432
    %605 = vmatpush.bf16.msra.mxu0 %v431
    %606 = vmatmul.bf16.gmra.mxu0 %v596
    %v607 = vpop.f32.mrf.mxu0
    %v608 = vadd.f32 %v548, %v607
    %v609 = vpop.f32.mrf.mxu0
    %610 = vdwg.mxu0
    %v611 = vadd.f32 %v608, %v452
    %v612 = vxor.u32 %v611, 2147483648
    %v613 = vmul.f32 %v612, 1.442695
    %v614 = vpow.pop %v613
    %v615 = vadd.f32 %v614, 1.0
    %v616 = vrcp.pop %v615
    %v617 = vmul.f32 %v615, %v616
    %v618 = vsub.f32 1.0, %v617
    %v619 = vmul.f32 %v616, %v618
    %v620 = vadd.f32 %v616, %v619
    %vm621 = vweird.f32 %v615
    %vm622 = vweird.f32 %v616
    %vm623 = vmor %vm621, %vm622
    %v624 = vsel %vm623, %v616, %v620
    %v625 = vand.u32 2147483647, %v615
    %vm626 = vcmp.eq.f32.partialorder %v625, 8.507059e+37
    %v627 = vand.u32 %v615, 2147483648
    %v628 = vor.u32 1.1754944e-38, %v627
    %v629 = vsel %vm626, %v628, %v624
    %v630 = vmul.f32 1.0, %v629
    %v631 = vtanh.pop %v611
    %v632 = vmul.f32 %v630, %v489
    %634 = vrot.lane.b32.xlu0 %v631, 32
    %v635 = vpop.permute.xlu0 %634
    %v637 = vmul.f32 %v630, %v635
    %639 = vrot.lane.b32.xlu0 %v637, 32
    %v640 = vpop.permute.xlu0 %639
    %v642 = vadd.f32 %v632, %v640
    %v643 = vtanh.pop %v642
    %645 = vrot.lane.b32.xlu0 %v643, 32
    %v646 = vpop.permute.xlu0 %645
    %v648 = vmul.f32 %v630, %v646
    %v649 = vpack.c.bf16 %v648, %v648
    %v651 = vrot.slane %v649, 3
    %v654 = vsel %vm499, %v649, %v651
    %656 = vrot.lane.b32.xlu0 %v654, 64
    %v657 = vpop.permute.xlu0 %656
    %s659 = scalar_lea.vmem [#allocation3], 1
    %660 = vst.msk [vmem:[%s659] sm:$0x1] %vm507, %v657
    %v661 = vadd.f32 %v509, %v648
    %v662 = vmul.f32 %v648, %v648
    %v663 = vadd.f32 %v511, %v662
    %665 = vrot.lane.b32.xlu0 %v590, 64
    %v666 = vpop.permute.xlu0 %665
    %669 = vrot.lane.b32.xlu0 %v648, 96
    %v670 = vpop.permute.xlu0 %669
    %v672 = vsel %vm343, %v666, %v670
    %v673 = vpack.c.bf16 %v672, %v672
    %v675 = vsel %vm346, %v673, 0
    %677 = vmatpush.bf16.msra.mxu0 0
    %678 = vmatpush.bf16.msra.mxu0 0
    %679 = vmatpush.bf16.msra.mxu0 0
    %680 = vmatpush.bf16.msra.mxu0 0
    %681 = vmatpush.bf16.msra.mxu0 0
    %682 = vmatpush.bf16.msra.mxu0 0
    %683 = vmatpush.bf16.msra.mxu0 %v318
    %684 = vmatpush.bf16.msra.mxu0 %v317
    %685 = vmatmul.bf16.gmra.mxu0 %v675
    %v686 = vpop.f32.mrf.mxu0
    %v687 = vadd.f32 0.0, %v686
    %v688 = vpop.f32.mrf.mxu0
    %689 = vdwg.mxu0
    %690 = vmatpush.bf16.msra.mxu0 0
    %691 = vmatpush.bf16.msra.mxu0 0
    %692 = vmatpush.bf16.msra.mxu0 0
    %693 = vmatpush.bf16.msra.mxu0 0
    %694 = vmatpush.bf16.msra.mxu0 %v330
    %695 = vmatpush.bf16.msra.mxu0 %v329
    %696 = vmatpush.bf16.msra.mxu0 0
    %697 = vmatpush.bf16.msra.mxu0 0
    %698 = vmatmul.bf16.gmra.mxu0 %v675
    %v699 = vpop.f32.mrf.mxu0
    %v700 = vadd.f32 0.0, %v699
    %v701 = vpop.f32.mrf.mxu0
    %702 = vdwg.mxu0
    %s703 = scalar_lea.vmem [#allocation2], 4
    %v704 = vld [vmem:[%s703] sm:$0x3]
    %v705 = vadd.f32 %v704, %v687
    %v706 = vxor.u32 %v705, 2147483648
    %v707 = vmul.f32 %v706, 1.442695
    %v708 = vpow.pop %v707
    %v709 = vadd.f32 %v708, 1.0
    %v710 = vrcp.pop %v709
    %v711 = vmul.f32 %v709, %v710
    %v712 = vsub.f32 1.0, %v711
    %v713 = vmul.f32 %v710, %v712
    %v714 = vadd.f32 %v710, %v713
    %vm715 = vweird.f32 %v709
    %vm716 = vweird.f32 %v710
    %vm717 = vmor %vm715, %vm716
    %v718 = vsel %vm717, %v710, %v714
    %v719 = vand.u32 2147483647, %v709
    %vm720 = vcmp.eq.f32.partialorder %v719, 8.507059e+37
    %v721 = vand.u32 %v709, 2147483648
    %v722 = vor.u32 1.1754944e-38, %v721
    %v723 = vsel %vm720, %v722, %v718
    %v724 = vmul.f32 1.0, %v723
    %v725 = vtanh.pop %v705
    %v726 = vmul.f32 %v724, %v584
    %728 = vrot.lane.b32.xlu0 %v725, 32
    %v729 = vpop.permute.xlu0 %728
    %v731 = vmul.f32 %v724, %v729
    %733 = vrot.lane.b32.xlu0 %v731, 32
    %v734 = vpop.permute.xlu0 %733
    %v736 = vadd.f32 %v726, %v734
    %v737 = vtanh.pop %v736
    %739 = vrot.lane.b32.xlu0 %v737, 32
    %v740 = vpop.permute.xlu0 %739
    %v742 = vmul.f32 %v724, %v740
    %v743 = vpack.c.bf16 %v742, %v742
    %745 = vrot.lane.b32.xlu0 %v743, 64
    %v746 = vpop.permute.xlu0 %745
    %v748 = vsel %vm343, %v746, 0
    %750 = vmatpush.bf16.msra.mxu0 0
    %751 = vmatpush.bf16.msra.mxu0 0
    %752 = vmatpush.bf16.msra.mxu0 0
    %753 = vmatpush.bf16.msra.mxu0 0
    %754 = vmatpush.bf16.msra.mxu0 0
    %755 = vmatpush.bf16.msra.mxu0 0
    %756 = vmatpush.bf16.msra.mxu0 %v432
    %757 = vmatpush.bf16.msra.mxu0 %v431
    %758 = vmatmul.bf16.gmra.mxu0 %v748
    %v759 = vpop.f32.mrf.mxu0
    %v760 = vadd.f32 %v700, %v759
    %v761 = vpop.f32.mrf.mxu0
    %762 = vdwg.mxu0
    %v763 = vadd.f32 %v760, %v452
    %v764 = vxor.u32 %v763, 2147483648
    %v765 = vmul.f32 %v764, 1.442695
    %v766 = vpow.pop %v765
    %v767 = vadd.f32 %v766, 1.0
    %v768 = vrcp.pop %v767
    %v769 = vmul.f32 %v767, %v768
    %v770 = vsub.f32 1.0, %v769
    %v771 = vmul.f32 %v768, %v770
    %v772 = vadd.f32 %v768, %v771
    %vm773 = vweird.f32 %v767
    %vm774 = vweird.f32 %v768
    %vm775 = vmor %vm773, %vm774
    %v776 = vsel %vm775, %v768, %v772
    %v777 = vand.u32 2147483647, %v767
    %vm778 = vcmp.eq.f32.partialorder %v777, 8.507059e+37
    %v779 = vand.u32 %v767, 2147483648
    %v780 = vor.u32 1.1754944e-38, %v779
    %v781 = vsel %vm778, %v780, %v776
    %v782 = vmul.f32 1.0, %v781
    %v783 = vtanh.pop %v763
    %v784 = vmul.f32 %v782, %v642
    %786 = vrot.lane.b32.xlu0 %v783, 32
    %v787 = vpop.permute.xlu0 %786
    %v789 = vmul.f32 %v782, %v787
    %791 = vrot.lane.b32.xlu0 %v789, 32
    %v792 = vpop.permute.xlu0 %791
    %v794 = vadd.f32 %v784, %v792
    %v795 = vtanh.pop %v794
    %797 = vrot.lane.b32.xlu0 %v795, 32
    %v798 = vpop.permute.xlu0 %797
    %v800 = vmul.f32 %v782, %v798
    %v801 = vpack.c.bf16 %v800, %v800
    %v803 = vrot.slane %v801, 3
    %v806 = vsel %vm499, %v801, %v803
    %808 = vrot.lane.b32.xlu0 %v806, 64
    %v809 = vpop.permute.xlu0 %808
    %s811 = scalar_lea.vmem [#allocation3], 2
    %812 = vst.msk [vmem:[%s811] sm:$0x1] %vm507, %v809
    %v813 = vadd.f32 %v661, %v800
    %v814 = vmul.f32 %v800, %v800
    %v815 = vadd.f32 %v663, %v814
    %817 = vrot.lane.b32.xlu0 %v742, 64
    %v818 = vpop.permute.xlu0 %817
    %821 = vrot.lane.b32.xlu0 %v800, 96
    %v822 = vpop.permute.xlu0 %821
    %v824 = vsel %vm343, %v818, %v822
    %v825 = vpack.c.bf16 %v824, %v824
    %v827 = vsel %vm346, %v825, 0
    %829 = vmatpush.bf16.msra.mxu0 0
    %830 = vmatpush.bf16.msra.mxu0 0
    %831 = vmatpush.bf16.msra.mxu0 0
    %832 = vmatpush.bf16.msra.mxu0 0
    %833 = vmatpush.bf16.msra.mxu0 0
    %834 = vmatpush.bf16.msra.mxu0 0
    %835 = vmatpush.bf16.msra.mxu0 %v318
    %836 = vmatpush.bf16.msra.mxu0 %v317
    %837 = vmatmul.bf16.gmra.mxu0 %v827
    %v838 = vpop.f32.mrf.mxu0
    %v839 = vadd.f32 0.0, %v838
    %v840 = vpop.f32.mrf.mxu0
    %841 = vdwg.mxu0
    %842 = vmatpush.bf16.msra.mxu0 0
    %843 = vmatpush.bf16.msra.mxu0 0
    %844 = vmatpush.bf16.msra.mxu0 0
    %845 = vmatpush.bf16.msra.mxu0 0
    %846 = vmatpush.bf16.msra.mxu0 %v330
    %847 = vmatpush.bf16.msra.mxu0 %v329
    %848 = vmatpush.bf16.msra.mxu0 0
    %849 = vmatpush.bf16.msra.mxu0 0
    %850 = vmatmul.bf16.gmra.mxu0 %v827
    %v851 = vpop.f32.mrf.mxu0
    %v852 = vadd.f32 0.0, %v851
    %v853 = vpop.f32.mrf.mxu0
    %854 = vdwg.mxu0
    %s855 = scalar_lea.vmem [#allocation2], 6
    %v856 = vld [vmem:[%s855] sm:$0x3]
    %v857 = vadd.f32 %v856, %v839
    %v858 = vxor.u32 %v857, 2147483648
    %v859 = vmul.f32 %v858, 1.442695
    %v860 = vpow.pop %v859
    %v861 = vadd.f32 %v860, 1.0
    %v862 = vrcp.pop %v861
    %v863 = vmul.f32 %v861, %v862
    %v864 = vsub.f32 1.0, %v863
    %v865 = vmul.f32 %v862, %v864
    %v866 = vadd.f32 %v862, %v865
    %vm867 = vweird.f32 %v861
    %vm868 = vweird.f32 %v862
    %vm869 = vmor %vm867, %vm868
    %v870 = vsel %vm869, %v862, %v866
    %v871 = vand.u32 2147483647, %v861
    %vm872 = vcmp.eq.f32.partialorder %v871, 8.507059e+37
    %v873 = vand.u32 %v861, 2147483648
    %v874 = vor.u32 1.1754944e-38, %v873
    %v875 = vsel %vm872, %v874, %v870
    %v876 = vmul.f32 1.0, %v875
    %v877 = vtanh.pop %v857
    %v878 = vmul.f32 %v876, %v736
    %880 = vrot.lane.b32.xlu0 %v877, 32
    %v881 = vpop.permute.xlu0 %880
    %v883 = vmul.f32 %v876, %v881
    %885 = vrot.lane.b32.xlu0 %v883, 32
    %v886 = vpop.permute.xlu0 %885
    %v888 = vadd.f32 %v878, %v886
    %v889 = vtanh.pop %v888
    %891 = vrot.lane.b32.xlu0 %v889, 32
    %v892 = vpop.permute.xlu0 %891
    %v894 = vmul.f32 %v876, %v892
    %v895 = vpack.c.bf16 %v894, %v894
    %897 = vrot.lane.b32.xlu0 %v895, 64
    %v898 = vpop.permute.xlu0 %897
    %v900 = vsel %vm343, %v898, 0
    %902 = vmatpush.bf16.msra.mxu0 0
    %903 = vmatpush.bf16.msra.mxu0 0
    %904 = vmatpush.bf16.msra.mxu0 0
    %905 = vmatpush.bf16.msra.mxu0 0
    %906 = vmatpush.bf16.msra.mxu0 0
    %907 = vmatpush.bf16.msra.mxu0 0
    %908 = vmatpush.bf16.msra.mxu0 %v432
    %909 = vmatpush.bf16.msra.mxu0 %v431
    %910 = vmatmul.bf16.gmra.mxu0 %v900
    %v911 = vpop.f32.mrf.mxu0
    %v912 = vadd.f32 %v852, %v911
    %v913 = vpop.f32.mrf.mxu0
    %914 = vdwg.mxu0
    %v915 = vadd.f32 %v912, %v452
    %v916 = vxor.u32 %v915, 2147483648
    %v917 = vmul.f32 %v916, 1.442695
    %v918 = vpow.pop %v917
    %v919 = vadd.f32 %v918, 1.0
    %v920 = vrcp.pop %v919
    %v921 = vmul.f32 %v919, %v920
    %v922 = vsub.f32 1.0, %v921
    %v923 = vmul.f32 %v920, %v922
    %v924 = vadd.f32 %v920, %v923
    %vm925 = vweird.f32 %v919
    %vm926 = vweird.f32 %v920
    %vm927 = vmor %vm925, %vm926
    %v928 = vsel %vm927, %v920, %v924
    %v929 = vand.u32 2147483647, %v919
    %vm930 = vcmp.eq.f32.partialorder %v929, 8.507059e+37
    %v931 = vand.u32 %v919, 2147483648
    %v932 = vor.u32 1.1754944e-38, %v931
    %v933 = vsel %vm930, %v932, %v928
    %v934 = vmul.f32 1.0, %v933
    %v935 = vtanh.pop %v915
    %v936 = vmul.f32 %v934, %v794
    %938 = vrot.lane.b32.xlu0 %v935, 32
    %v939 = vpop.permute.xlu0 %938
    %v941 = vmul.f32 %v934, %v939
    %943 = vrot.lane.b32.xlu0 %v941, 32
    %v944 = vpop.permute.xlu0 %943
    %v946 = vadd.f32 %v936, %v944
    %v947 = vtanh.pop %v946
    %949 = vrot.lane.b32.xlu0 %v947, 32
    %v950 = vpop.permute.xlu0 %949
    %v952 = vmul.f32 %v934, %v950
    %v953 = vpack.c.bf16 %v952, %v952
    %v955 = vrot.slane %v953, 3
    %v958 = vsel %vm499, %v953, %v955
    %960 = vrot.lane.b32.xlu0 %v958, 64
    %v961 = vpop.permute.xlu0 %960
    %s963 = scalar_lea.vmem [#allocation3], 3
    %964 = vst.msk [vmem:[%s963] sm:$0x1] %vm507, %v961
    %v965 = vadd.f32 %v813, %v952
    %v966 = vmul.f32 %v952, %v952
    %v967 = vadd.f32 %v815, %v966
    %969 = vrot.lane.b32.xlu0 %v894, 64
    %v970 = vpop.permute.xlu0 %969
    %973 = vrot.lane.b32.xlu0 %v952, 96
    %v974 = vpop.permute.xlu0 %973
    %v976 = vsel %vm343, %v970, %v974
    %v977 = vpack.c.bf16 %v976, %v976
    %v979 = vsel %vm346, %v977, 0
    %981 = vmatpush.bf16.msra.mxu0 0
    %982 = vmatpush.bf16.msra.mxu0 0
    %983 = vmatpush.bf16.msra.mxu0 0
    %984 = vmatpush.bf16.msra.mxu0 0
    %985 = vmatpush.bf16.msra.mxu0 0
    %986 = vmatpush.bf16.msra.mxu0 0
    %987 = vmatpush.bf16.msra.mxu0 %v318
    %988 = vmatpush.bf16.msra.mxu0 %v317
    %989 = vmatmul.bf16.gmra.mxu0 %v979
    %v990 = vpop.f32.mrf.mxu0
    %v991 = vadd.f32 0.0, %v990
    %v992 = vpop.f32.mrf.mxu0
    %993 = vdwg.mxu0
    %994 = vmatpush.bf16.msra.mxu0 0
    %995 = vmatpush.bf16.msra.mxu0 0
    %996 = vmatpush.bf16.msra.mxu0 0
    %997 = vmatpush.bf16.msra.mxu0 0
    %998 = vmatpush.bf16.msra.mxu0 %v330
    %999 = vmatpush.bf16.msra.mxu0 %v329
    %1000 = vmatpush.bf16.msra.mxu0 0
    %1001 = vmatpush.bf16.msra.mxu0 0
    %1002 = vmatmul.bf16.gmra.mxu0 %v979
    %v1003 = vpop.f32.mrf.mxu0
    %v1004 = vadd.f32 0.0, %v1003
    %v1005 = vpop.f32.mrf.mxu0
    %1006 = vdwg.mxu0
    %s1007 = scalar_lea.vmem [#allocation2], 8
    %v1008 = vld [vmem:[%s1007] sm:$0x3]
    %v1009 = vadd.f32 %v1008, %v991
    %v1010 = vxor.u32 %v1009, 2147483648
    %v1011 = vmul.f32 %v1010, 1.442695
    %v1012 = vpow.pop %v1011
    %v1013 = vadd.f32 %v1012, 1.0
    %v1014 = vrcp.pop %v1013
    %v1015 = vmul.f32 %v1013, %v1014
    %v1016 = vsub.f32 1.0, %v1015
    %v1017 = vmul.f32 %v1014, %v1016
    %v1018 = vadd.f32 %v1014, %v1017
    %vm1019 = vweird.f32 %v1013
    %vm1020 = vweird.f32 %v1014
    %vm1021 = vmor %vm1019, %vm1020
    %v1022 = vsel %vm1021, %v1014, %v1018
    %v1023 = vand.u32 2147483647, %v1013
    %vm1024 = vcmp.eq.f32.partialorder %v1023, 8.507059e+37
    %v1025 = vand.u32 %v1013, 2147483648
    %v1026 = vor.u32 1.1754944e-38, %v1025
    %v1027 = vsel %vm1024, %v1026, %v1022
    %v1028 = vmul.f32 1.0, %v1027
    %v1029 = vtanh.pop %v1009
    %v1030 = vmul.f32 %v1028, %v888
    %1032 = vrot.lane.b32.xlu0 %v1029, 32
    %v1033 = vpop.permute.xlu0 %1032
    %v1035 = vmul.f32 %v1028, %v1033
    %1037 = vrot.lane.b32.xlu0 %v1035, 32
    %v1038 = vpop.permute.xlu0 %1037
    %v1040 = vadd.f32 %v1030, %v1038
    %v1041 = vtanh.pop %v1040
    %1043 = vrot.lane.b32.xlu0 %v1041, 32
    %v1044 = vpop.permute.xlu0 %1043
    %v1046 = vmul.f32 %v1028, %v1044
    %v1047 = vpack.c.bf16 %v1046, %v1046
    %1049 = vrot.lane.b32.xlu0 %v1047, 64
    %v1050 = vpop.permute.xlu0 %1049
    %v1052 = vsel %vm343, %v1050, 0
    %1054 = vmatpush.bf16.msra.mxu0 0
    %1055 = vmatpush.bf16.msra.mxu0 0
    %1056 = vmatpush.bf16.msra.mxu0 0
    %1057 = vmatpush.bf16.msra.mxu0 0
    %1058 = vmatpush.bf16.msra.mxu0 0
    %1059 = vmatpush.bf16.msra.mxu0 0
    %1060 = vmatpush.bf16.msra.mxu0 %v432
    %1061 = vmatpush.bf16.msra.mxu0 %v431
    %1062 = vmatmul.bf16.gmra.mxu0 %v1052
    %v1063 = vpop.f32.mrf.mxu0
    %v1064 = vadd.f32 %v1004, %v1063
    %v1065 = vpop.f32.mrf.mxu0
    %1066 = vdwg.mxu0
    %v1067 = vadd.f32 %v1064, %v452
    %v1068 = vxor.u32 %v1067, 2147483648
    %v1069 = vmul.f32 %v1068, 1.442695
    %v1070 = vpow.pop %v1069
    %v1071 = vadd.f32 %v1070, 1.0
    %v1072 = vrcp.pop %v1071
    %v1073 = vmul.f32 %v1071, %v1072
    %v1074 = vsub.f32 1.0, %v1073
    %v1075 = vmul.f32 %v1072, %v1074
    %v1076 = vadd.f32 %v1072, %v1075
    %vm1077 = vweird.f32 %v1071
    %vm1078 = vweird.f32 %v1072
    %vm1079 = vmor %vm1077, %vm1078
    %v1080 = vsel %vm1079, %v1072, %v1076
    %v1081 = vand.u32 2147483647, %v1071
    %vm1082 = vcmp.eq.f32.partialorder %v1081, 8.507059e+37
    %v1083 = vand.u32 %v1071, 2147483648
    %v1084 = vor.u32 1.1754944e-38, %v1083
    %v1085 = vsel %vm1082, %v1084, %v1080
    %v1086 = vmul.f32 1.0, %v1085
    %v1087 = vtanh.pop %v1067
    %v1088 = vmul.f32 %v1086, %v946
    %1090 = vrot.lane.b32.xlu0 %v1087, 32
    %v1091 = vpop.permute.xlu0 %1090
    %v1093 = vmul.f32 %v1086, %v1091
    %1095 = vrot.lane.b32.xlu0 %v1093, 32
    %v1096 = vpop.permute.xlu0 %1095
    %v1098 = vadd.f32 %v1088, %v1096
    %v1099 = vtanh.pop %v1098
    %1101 = vrot.lane.b32.xlu0 %v1099, 32
    %v1102 = vpop.permute.xlu0 %1101
    %v1104 = vmul.f32 %v1086, %v1102
    %v1105 = vpack.c.bf16 %v1104, %v1104
    %v1107 = vrot.slane %v1105, 3
    %v1110 = vsel %vm499, %v1105, %v1107
    %1112 = vrot.lane.b32.xlu0 %v1110, 64
    %v1113 = vpop.permute.xlu0 %1112
    %s1115 = scalar_lea.vmem [#allocation3], 4
    %1116 = vst.msk [vmem:[%s1115] sm:$0x1] %vm507, %v1113
    %v1117 = vadd.f32 %v965, %v1104
    %v1118 = vmul.f32 %v1104, %v1104
    %v1119 = vadd.f32 %v967, %v1118
    %1121 = vrot.lane.b32.xlu0 %v1046, 64
    %v1122 = vpop.permute.xlu0 %1121
    %1125 = vrot.lane.b32.xlu0 %v1104, 96
    %v1126 = vpop.permute.xlu0 %1125
    %v1128 = vsel %vm343, %v1122, %v1126
    %v1129 = vpack.c.bf16 %v1128, %v1128
    %v1131 = vsel %vm346, %v1129, 0
    %1133 = vmatpush.bf16.msra.mxu0 0
    %1134 = vmatpush.bf16.msra.mxu0 0
    %1135 = vmatpush.bf16.msra.mxu0 0
    %1136 = vmatpush.bf16.msra.mxu0 0
    %1137 = vmatpush.bf16.msra.mxu0 0
    %1138 = vmatpush.bf16.msra.mxu0 0
    %1139 = vmatpush.bf16.msra.mxu0 %v318
    %1140 = vmatpush.bf16.msra.mxu0 %v317
    %1141 = vmatmul.bf16.gmra.mxu0 %v1131
    %v1142 = vpop.f32.mrf.mxu0
    %v1143 = vadd.f32 0.0, %v1142
    %v1144 = vpop.f32.mrf.mxu0
    %1145 = vdwg.mxu0
    %1146 = vmatpush.bf16.msra.mxu0 0
    %1147 = vmatpush.bf16.msra.mxu0 0
    %1148 = vmatpush.bf16.msra.mxu0 0
    %1149 = vmatpush.bf16.msra.mxu0 0
    %1150 = vmatpush.bf16.msra.mxu0 %v330
    %1151 = vmatpush.bf16.msra.mxu0 %v329
    %1152 = vmatpush.bf16.msra.mxu0 0
    %1153 = vmatpush.bf16.msra.mxu0 0
    %1154 = vmatmul.bf16.gmra.mxu0 %v1131
    %v1155 = vpop.f32.mrf.mxu0
    %v1156 = vadd.f32 0.0, %v1155
    %v1157 = vpop.f32.mrf.mxu0
    %1158 = vdwg.mxu0
    %s1159 = scalar_lea.vmem [#allocation2], 10
    %v1160 = vld [vmem:[%s1159] sm:$0x3]
    %v1161 = vadd.f32 %v1160, %v1143
    %v1162 = vxor.u32 %v1161, 2147483648
    %v1163 = vmul.f32 %v1162, 1.442695
    %v1164 = vpow.pop %v1163
    %v1165 = vadd.f32 %v1164, 1.0
    %v1166 = vrcp.pop %v1165
    %v1167 = vmul.f32 %v1165, %v1166
    %v1168 = vsub.f32 1.0, %v1167
    %v1169 = vmul.f32 %v1166, %v1168
    %v1170 = vadd.f32 %v1166, %v1169
    %vm1171 = vweird.f32 %v1165
    %vm1172 = vweird.f32 %v1166
    %vm1173 = vmor %vm1171, %vm1172
    %v1174 = vsel %vm1173, %v1166, %v1170
    %v1175 = vand.u32 2147483647, %v1165
    %vm1176 = vcmp.eq.f32.partialorder %v1175, 8.507059e+37
    %v1177 = vand.u32 %v1165, 2147483648
    %v1178 = vor.u32 1.1754944e-38, %v1177
    %v1179 = vsel %vm1176, %v1178, %v1174
    %v1180 = vmul.f32 1.0, %v1179
    %v1181 = vtanh.pop %v1161
    %v1182 = vmul.f32 %v1180, %v1040
    %1184 = vrot.lane.b32.xlu0 %v1181, 32
    %v1185 = vpop.permute.xlu0 %1184
    %v1187 = vmul.f32 %v1180, %v1185
    %1189 = vrot.lane.b32.xlu0 %v1187, 32
    %v1190 = vpop.permute.xlu0 %1189
    %v1192 = vadd.f32 %v1182, %v1190
    %v1193 = vtanh.pop %v1192
    %1195 = vrot.lane.b32.xlu0 %v1193, 32
    %v1196 = vpop.permute.xlu0 %1195
    %v1198 = vmul.f32 %v1180, %v1196
    %v1199 = vpack.c.bf16 %v1198, %v1198
    %1201 = vrot.lane.b32.xlu0 %v1199, 64
    %v1202 = vpop.permute.xlu0 %1201
    %v1204 = vsel %vm343, %v1202, 0
    %1206 = vmatpush.bf16.msra.mxu0 0
    %1207 = vmatpush.bf16.msra.mxu0 0
    %1208 = vmatpush.bf16.msra.mxu0 0
    %1209 = vmatpush.bf16.msra.mxu0 0
    %1210 = vmatpush.bf16.msra.mxu0 0
    %1211 = vmatpush.bf16.msra.mxu0 0
    %1212 = vmatpush.bf16.msra.mxu0 %v432
    %1213 = vmatpush.bf16.msra.mxu0 %v431
    %1214 = vmatmul.bf16.gmra.mxu0 %v1204
    %v1215 = vpop.f32.mrf.mxu0
    %v1216 = vadd.f32 %v1156, %v1215
    %v1217 = vpop.f32.mrf.mxu0
    %1218 = vdwg.mxu0
    %v1219 = vadd.f32 %v1216, %v452
    %v1220 = vxor.u32 %v1219, 2147483648
    %v1221 = vmul.f32 %v1220, 1.442695
    %v1222 = vpow.pop %v1221
    %v1223 = vadd.f32 %v1222, 1.0
    %v1224 = vrcp.pop %v1223
    %v1225 = vmul.f32 %v1223, %v1224
    %v1226 = vsub.f32 1.0, %v1225
    %v1227 = vmul.f32 %v1224, %v1226
    %v1228 = vadd.f32 %v1224, %v1227
    %vm1229 = vweird.f32 %v1223
    %vm1230 = vweird.f32 %v1224
    %vm1231 = vmor %vm1229, %vm1230
    %v1232 = vsel %vm1231, %v1224, %v1228
    %v1233 = vand.u32 2147483647, %v1223
    %vm1234 = vcmp.eq.f32.partialorder %v1233, 8.507059e+37
    %v1235 = vand.u32 %v1223, 2147483648
    %v1236 = vor.u32 1.1754944e-38, %v1235
    %v1237 = vsel %vm1234, %v1236, %v1232
    %v1238 = vmul.f32 1.0, %v1237
    %v1239 = vtanh.pop %v1219
    %v1240 = vmul.f32 %v1238, %v1098
    %1242 = vrot.lane.b32.xlu0 %v1239, 32
    %v1243 = vpop.permute.xlu0 %1242
    %v1245 = vmul.f32 %v1238, %v1243
    %1247 = vrot.lane.b32.xlu0 %v1245, 32
    %v1248 = vpop.permute.xlu0 %1247
    %v1250 = vadd.f32 %v1240, %v1248
    %v1251 = vtanh.pop %v1250
    %1253 = vrot.lane.b32.xlu0 %v1251, 32
    %v1254 = vpop.permute.xlu0 %1253
    %v1256 = vmul.f32 %v1238, %v1254
    %v1257 = vpack.c.bf16 %v1256, %v1256
    %v1259 = vrot.slane %v1257, 3
    %v1262 = vsel %vm499, %v1257, %v1259
    %1264 = vrot.lane.b32.xlu0 %v1262, 64
    %v1265 = vpop.permute.xlu0 %1264
    %s1267 = scalar_lea.vmem [#allocation3], 5
    %1268 = vst.msk [vmem:[%s1267] sm:$0x1] %vm507, %v1265
    %v1269 = vadd.f32 %v1117, %v1256
    %v1270 = vmul.f32 %v1256, %v1256
    %v1271 = vadd.f32 %v1119, %v1270
    %1273 = vrot.lane.b32.xlu0 %v1198, 64
    %v1274 = vpop.permute.xlu0 %1273
    %1277 = vrot.lane.b32.xlu0 %v1256, 96
    %v1278 = vpop.permute.xlu0 %1277
    %v1280 = vsel %vm343, %v1274, %v1278
    %v1281 = vpack.c.bf16 %v1280, %v1280
    %v1283 = vsel %vm346, %v1281, 0
    %1285 = vmatpush.bf16.msra.mxu0 0
    %1286 = vmatpush.bf16.msra.mxu0 0
    %1287 = vmatpush.bf16.msra.mxu0 0
    %1288 = vmatpush.bf16.msra.mxu0 0
    %1289 = vmatpush.bf16.msra.mxu0 0
    %1290 = vmatpush.bf16.msra.mxu0 0
    %1291 = vmatpush.bf16.msra.mxu0 %v318
    %1292 = vmatpush.bf16.msra.mxu0 %v317
    %1293 = vmatmul.bf16.gmra.mxu0 %v1283
    %v1294 = vpop.f32.mrf.mxu0
    %v1295 = vadd.f32 0.0, %v1294
    %v1296 = vpop.f32.mrf.mxu0
    %1297 = vdwg.mxu0
    %1298 = vmatpush.bf16.msra.mxu0 0
    %1299 = vmatpush.bf16.msra.mxu0 0
    %1300 = vmatpush.bf16.msra.mxu0 0
    %1301 = vmatpush.bf16.msra.mxu0 0
    %1302 = vmatpush.bf16.msra.mxu0 %v330
    %1303 = vmatpush.bf16.msra.mxu0 %v329
    %1304 = vmatpush.bf16.msra.mxu0 0
    %1305 = vmatpush.bf16.msra.mxu0 0
    %1306 = vmatmul.bf16.gmra.mxu0 %v1283
    %v1307 = vpop.f32.mrf.mxu0
    %v1308 = vadd.f32 0.0, %v1307
    %v1309 = vpop.f32.mrf.mxu0
    %1310 = vdwg.mxu0
    %s1311 = scalar_lea.vmem [#allocation2], 12
    %v1312 = vld [vmem:[%s1311] sm:$0x3]
    %v1313 = vadd.f32 %v1312, %v1295
    %v1314 = vxor.u32 %v1313, 2147483648
    %v1315 = vmul.f32 %v1314, 1.442695
    %v1316 = vpow.pop %v1315
    %v1317 = vadd.f32 %v1316, 1.0
    %v1318 = vrcp.pop %v1317
    %v1319 = vmul.f32 %v1317, %v1318
    %v1320 = vsub.f32 1.0, %v1319
    %v1321 = vmul.f32 %v1318, %v1320
    %v1322 = vadd.f32 %v1318, %v1321
    %vm1323 = vweird.f32 %v1317
    %vm1324 = vweird.f32 %v1318
    %vm1325 = vmor %vm1323, %vm1324
    %v1326 = vsel %vm1325, %v1318, %v1322
    %v1327 = vand.u32 2147483647, %v1317
    %vm1328 = vcmp.eq.f32.partialorder %v1327, 8.507059e+37
    %v1329 = vand.u32 %v1317, 2147483648
    %v1330 = vor.u32 1.1754944e-38, %v1329
    %v1331 = vsel %vm1328, %v1330, %v1326
    %v1332 = vmul.f32 1.0, %v1331
    %v1333 = vtanh.pop %v1313
    %v1334 = vmul.f32 %v1332, %v1192
    %1336 = vrot.lane.b32.xlu0 %v1333, 32
    %v1337 = vpop.permute.xlu0 %1336
    %v1339 = vmul.f32 %v1332, %v1337
    %1341 = vrot.lane.b32.xlu0 %v1339, 32
    %v1342 = vpop.permute.xlu0 %1341
    %v1344 = vadd.f32 %v1334, %v1342
    %v1345 = vtanh.pop %v1344
    %1347 = vrot.lane.b32.xlu0 %v1345, 32
    %v1348 = vpop.permute.xlu0 %1347
    %v1350 = vmul.f32 %v1332, %v1348
    %v1351 = vpack.c.bf16 %v1350, %v1350
    %1353 = vrot.lane.b32.xlu0 %v1351, 64
    %v1354 = vpop.permute.xlu0 %1353
    %v1356 = vsel %vm343, %v1354, 0
    %1358 = vmatpush.bf16.msra.mxu0 0
    %1359 = vmatpush.bf16.msra.mxu0 0
    %1360 = vmatpush.bf16.msra.mxu0 0
    %1361 = vmatpush.bf16.msra.mxu0 0
    %1362 = vmatpush.bf16.msra.mxu0 0
    %1363 = vmatpush.bf16.msra.mxu0 0
    %1364 = vmatpush.bf16.msra.mxu0 %v432
    %1365 = vmatpush.bf16.msra.mxu0 %v431
    %1366 = vmatmul.bf16.gmra.mxu0 %v1356
    %v1367 = vpop.f32.mrf.mxu0
    %v1368 = vadd.f32 %v1308, %v1367
    %v1369 = vpop.f32.mrf.mxu0
    %1370 = vdwg.mxu0
    %v1371 = vadd.f32 %v1368, %v452
    %v1372 = vxor.u32 %v1371, 2147483648
    %v1373 = vmul.f32 %v1372, 1.442695
    %v1374 = vpow.pop %v1373
    %v1375 = vadd.f32 %v1374, 1.0
    %v1376 = vrcp.pop %v1375
    %v1377 = vmul.f32 %v1375, %v1376
    %v1378 = vsub.f32 1.0, %v1377
    %v1379 = vmul.f32 %v1376, %v1378
    %v1380 = vadd.f32 %v1376, %v1379
    %vm1381 = vweird.f32 %v1375
    %vm1382 = vweird.f32 %v1376
    %vm1383 = vmor %vm1381, %vm1382
    %v1384 = vsel %vm1383, %v1376, %v1380
    %v1385 = vand.u32 2147483647, %v1375
    %vm1386 = vcmp.eq.f32.partialorder %v1385, 8.507059e+37
    %v1387 = vand.u32 %v1375, 2147483648
    %v1388 = vor.u32 1.1754944e-38, %v1387
    %v1389 = vsel %vm1386, %v1388, %v1384
    %v1390 = vmul.f32 1.0, %v1389
    %v1391 = vtanh.pop %v1371
    %v1392 = vmul.f32 %v1390, %v1250
    %1394 = vrot.lane.b32.xlu0 %v1391, 32
    %v1395 = vpop.permute.xlu0 %1394
    %v1397 = vmul.f32 %v1390, %v1395
    %1399 = vrot.lane.b32.xlu0 %v1397, 32
    %v1400 = vpop.permute.xlu0 %1399
    %v1402 = vadd.f32 %v1392, %v1400
    %v1403 = vtanh.pop %v1402
    %1405 = vrot.lane.b32.xlu0 %v1403, 32
    %v1406 = vpop.permute.xlu0 %1405
    %v1408 = vmul.f32 %v1390, %v1406
    %v1409 = vpack.c.bf16 %v1408, %v1408
    %v1411 = vrot.slane %v1409, 3
    %v1414 = vsel %vm499, %v1409, %v1411
    %1416 = vrot.lane.b32.xlu0 %v1414, 64
    %v1417 = vpop.permute.xlu0 %1416
    %s1419 = scalar_lea.vmem [#allocation3], 6
    %1420 = vst.msk [vmem:[%s1419] sm:$0x1] %vm507, %v1417
    %v1421 = vadd.f32 %v1269, %v1408
    %v1422 = vmul.f32 %v1408, %v1408
    %v1423 = vadd.f32 %v1271, %v1422
    %1425 = vrot.lane.b32.xlu0 %v1350, 64
    %v1426 = vpop.permute.xlu0 %1425
    %1429 = vrot.lane.b32.xlu0 %v1408, 96
    %v1430 = vpop.permute.xlu0 %1429
    %v1432 = vsel %vm343, %v1426, %v1430
    %v1433 = vpack.c.bf16 %v1432, %v1432
    %v1435 = vsel %vm346, %v1433, 0
    %1437 = vmatpush.bf16.msra.mxu0 0
    %1438 = vmatpush.bf16.msra.mxu0 0
    %1439 = vmatpush.bf16.msra.mxu0 0
    %1440 = vmatpush.bf16.msra.mxu0 0
    %1441 = vmatpush.bf16.msra.mxu0 0
    %1442 = vmatpush.bf16.msra.mxu0 0
    %1443 = vmatpush.bf16.msra.mxu0 %v318
    %1444 = vmatpush.bf16.msra.mxu0 %v317
    %1445 = vmatmul.bf16.gmra.mxu0 %v1435
    %v1446 = vpop.f32.mrf.mxu0
    %v1447 = vadd.f32 0.0, %v1446
    %v1448 = vpop.f32.mrf.mxu0
    %1449 = vdwg.mxu0
    %1450 = vmatpush.bf16.msra.mxu0 0
    %1451 = vmatpush.bf16.msra.mxu0 0
    %1452 = vmatpush.bf16.msra.mxu0 0
    %1453 = vmatpush.bf16.msra.mxu0 0
    %1454 = vmatpush.bf16.msra.mxu0 %v330
    %1455 = vmatpush.bf16.msra.mxu0 %v329
    %1456 = vmatpush.bf16.msra.mxu0 0
    %1457 = vmatpush.bf16.msra.mxu0 0
    %1458 = vmatmul.bf16.gmra.mxu0 %v1435
    %v1459 = vpop.f32.mrf.mxu0
    %v1460 = vadd.f32 0.0, %v1459
    %v1461 = vpop.f32.mrf.mxu0
    %1462 = vdwg.mxu0
    %s1463 = scalar_lea.vmem [#allocation2], 14
    %v1464 = vld [vmem:[%s1463] sm:$0x3]
    %v1465 = vadd.f32 %v1464, %v1447
    %v1466 = vxor.u32 %v1465, 2147483648
    %v1467 = vmul.f32 %v1466, 1.442695
    %v1468 = vpow.pop %v1467
    %v1469 = vadd.f32 %v1468, 1.0
    %v1470 = vrcp.pop %v1469
    %v1471 = vmul.f32 %v1469, %v1470
    %v1472 = vsub.f32 1.0, %v1471
    %v1473 = vmul.f32 %v1470, %v1472
    %v1474 = vadd.f32 %v1470, %v1473
    %vm1475 = vweird.f32 %v1469
    %vm1476 = vweird.f32 %v1470
    %vm1477 = vmor %vm1475, %vm1476
    %v1478 = vsel %vm1477, %v1470, %v1474
    %v1479 = vand.u32 2147483647, %v1469
    %vm1480 = vcmp.eq.f32.partialorder %v1479, 8.507059e+37
    %v1481 = vand.u32 %v1469, 2147483648
    %v1482 = vor.u32 1.1754944e-38, %v1481
    %v1483 = vsel %vm1480, %v1482, %v1478
    %v1484 = vmul.f32 1.0, %v1483
    %v1485 = vtanh.pop %v1465
    %v1486 = vmul.f32 %v1484, %v1344
    %1488 = vrot.lane.b32.xlu0 %v1485, 32
    %v1489 = vpop.permute.xlu0 %1488
    %v1491 = vmul.f32 %v1484, %v1489
    %1493 = vrot.lane.b32.xlu0 %v1491, 32
    %v1494 = vpop.permute.xlu0 %1493
    %v1496 = vadd.f32 %v1486, %v1494
    %v1497 = vtanh.pop %v1496
    %1499 = vrot.lane.b32.xlu0 %v1497, 32
    %v1500 = vpop.permute.xlu0 %1499
    %v1502 = vmul.f32 %v1484, %v1500
    %v1503 = vpack.c.bf16 %v1502, %v1502
    %1505 = vrot.lane.b32.xlu0 %v1503, 64
    %v1506 = vpop.permute.xlu0 %1505
    %v1508 = vsel %vm343, %v1506, 0
    %1510 = vmatpush.bf16.msra.mxu0 0
    %1511 = vmatpush.bf16.msra.mxu0 0
    %1512 = vmatpush.bf16.msra.mxu0 0
    %1513 = vmatpush.bf16.msra.mxu0 0
    %1514 = vmatpush.bf16.msra.mxu0 0
    %1515 = vmatpush.bf16.msra.mxu0 0
    %1516 = vmatpush.bf16.msra.mxu0 %v432
    %1517 = vmatpush.bf16.msra.mxu0 %v431
    %1518 = vmatmul.bf16.gmra.mxu0 %v1508
    %v1519 = vpop.f32.mrf.mxu0
    %v1520 = vadd.f32 %v1460, %v1519
    %v1521 = vpop.f32.mrf.mxu0
    %1522 = vdwg.mxu0
    %v1523 = vadd.f32 %v1520, %v452
    %v1524 = vxor.u32 %v1523, 2147483648
    %v1525 = vmul.f32 %v1524, 1.442695
    %v1526 = vpow.pop %v1525
    %v1527 = vadd.f32 %v1526, 1.0
    %v1528 = vrcp.pop %v1527
    %v1529 = vmul.f32 %v1527, %v1528
    %v1530 = vsub.f32 1.0, %v1529
    %v1531 = vmul.f32 %v1528, %v1530
    %v1532 = vadd.f32 %v1528, %v1531
    %vm1533 = vweird.f32 %v1527
    %vm1534 = vweird.f32 %v1528
    %vm1535 = vmor %vm1533, %vm1534
    %v1536 = vsel %vm1535, %v1528, %v1532
    %v1537 = vand.u32 2147483647, %v1527
    %vm1538 = vcmp.eq.f32.partialorder %v1537, 8.507059e+37
    %v1539 = vand.u32 %v1527, 2147483648
    %v1540 = vor.u32 1.1754944e-38, %v1539
    %v1541 = vsel %vm1538, %v1540, %v1536
    %v1542 = vmul.f32 1.0, %v1541
    %v1543 = vtanh.pop %v1523
    %v1544 = vmul.f32 %v1542, %v1402
    %1546 = vrot.lane.b32.xlu0 %v1543, 32
    %v1547 = vpop.permute.xlu0 %1546
    %v1549 = vmul.f32 %v1542, %v1547
    %1551 = vrot.lane.b32.xlu0 %v1549, 32
    %v1552 = vpop.permute.xlu0 %1551
    %v1554 = vadd.f32 %v1544, %v1552
    %v1555 = vtanh.pop %v1554
    %1557 = vrot.lane.b32.xlu0 %v1555, 32
    %v1558 = vpop.permute.xlu0 %1557
    %v1560 = vmul.f32 %v1542, %v1558
    %v1561 = vpack.c.bf16 %v1560, %v1560
    %v1563 = vrot.slane %v1561, 3
    %v1566 = vsel %vm499, %v1561, %v1563
    %1568 = vrot.lane.b32.xlu0 %v1566, 64
    %v1569 = vpop.permute.xlu0 %1568
    %s1571 = scalar_lea.vmem [#allocation3], 7
    %1572 = vst.msk [vmem:[%s1571] sm:$0x1] %vm507, %v1569
    %v1573 = vadd.f32 %v1421, %v1560
    %v1574 = vmul.f32 %v1560, %v1560
    %v1575 = vadd.f32 %v1423, %v1574
    %1577 = vrot.lane.b32.xlu0 %v1502, 64
    %v1578 = vpop.permute.xlu0 %1577
    %vm1580 = vcmask 254976
    %1581 = vst.msk [vmem:[#allocation4] sm:$0x3] %vm1580, %v1578
    %1583 = vrot.lane.b32.xlu0 %v1560, 64
    %v1584 = vpop.permute.xlu0 %1583
    %s1586 = scalar_lea.vmem [#allocation4], 2
    %1587 = vst.msk [vmem:[%s1586] sm:$0x3] %vm1580, %v1584
    %1589 = vrot.lane.b32.xlu0 %v1496, 96
    %v1590 = vpop.permute.xlu0 %1589
    %1592 = vst.msk [vmem:[#allocation6] sm:$0x3] %vm1580, %v1590
    %1594 = vrot.lane.b32.xlu0 %v1554, 96
    %v1595 = vpop.permute.xlu0 %1594
    %s1597 = scalar_lea.vmem [#allocation6], 2
    %1598 = vst.msk [vmem:[%s1597] sm:$0x3] %vm1580, %v1595
    %vm1599 = vcmask 779776
    %v1600 = vsel %vm1599, %v1573, 0.0
    %v1601 = vrot.slane %v1600, 4
    %v1602 = vadd.f32 %v1600, %v1601
    %v1603 = vrot.slane %v1602, 2
    %v1604 = vadd.f32 %v1602, %v1603
    %v1605 = vrot.slane %v1604, 1
    %v1606 = vadd.f32 %v1604, %v1605
    %v1607 = vmul.f32 %v1606, %v107
    %v1608 = vsel %vm1599, %v1575, 0.0
    %v1609 = vrot.slane %v1608, 4
    %v1610 = vadd.f32 %v1608, %v1609
    %v1611 = vrot.slane %v1610, 2
    %v1612 = vadd.f32 %v1610, %v1611
    %v1613 = vrot.slane %v1612, 1
    %v1614 = vadd.f32 %v1612, %v1613
    %v1615 = vmul.f32 %v1614, %v107
    %v1616 = vmul.f32 %v1607, %v1607
    %v1617 = vsub.f32 %v1615, %v1616
    %v1618 = vmax.f32 %v1617, 0.0
    %v1619 = vld [vmem:[%s11] sm:$0x1]
    %v1620 = vadd.f32 %v1618, 1e-05
    %v1621 = vrsqrt.pop %v1620
    %v1622 = vmul.f32 %v1621, %v1620
    %v1623 = vmul.f32 %v1622, %v1621
    %v1624 = vmul.f32 0.5, %v1623
    %v1625 = vsub.f32 1.5, %v1624
    %v1626 = vmul.f32 %v1621, %v1625
    %vm1627 = vweird.f32 %v1620
    %vm1628 = vweird.f32 %v1621
    %vm1629 = vmor %vm1627, %vm1628
    %v1630 = vsel %vm1629, %v1621, %v1626
    %1632 = vrot.lane.b32.xlu0 %v1630, 64
    %v1633 = vpop.permute.xlu0 %1632
    %v1635 = vmul.f32 %v1619, %v1633
    %v1636 = vld [vmem:[%s12] sm:$0x1]
    %v1638 = vperm.slane %v1635, 0
    %1639 = vrot.lane.b32.xlu0 %v1638, 64
    %v1640 = vpop.permute.xlu0 %1639
    %v1642 = vmul.f32 %v1607, %v1640
    %1644 = vrot.lane.b32.xlu0 %v1642, 64
    %v1645 = vpop.permute.xlu0 %1644
    %v1647 = vsub.f32 %v1636, %v1645
    %v1648 = vld [vmem:[#allocation3] sm:$0x1]
    %v1649 = vld [vmem:[#allocation3 + $0x1] sm:$0x1]
    %v1650 = vld [vmem:[#allocation3 + $0x2] sm:$0x1]
    %v1651 = vld [vmem:[#allocation3 + $0x3] sm:$0x1]
    %v1652 = vld [vmem:[#allocation3 + $0x4] sm:$0x1]
    %v1653 = vld [vmem:[#allocation3 + $0x5] sm:$0x1]
    %v1654 = vld [vmem:[#allocation3 + $0x6] sm:$0x1]
    %v1655 = vld [vmem:[#allocation3 + $0x7] sm:$0x1]
    %v1656 = vunpack.c.l.bf16 %v1648
    %v1657 = vunpack.c.l.bf16 %v1649
    %v1658 = vunpack.c.l.bf16 %v1650
    %v1659 = vunpack.c.l.bf16 %v1651
    %v1660 = vunpack.c.l.bf16 %v1652
    %v1661 = vunpack.c.l.bf16 %v1653
    %v1662 = vunpack.c.l.bf16 %v1654
    %v1663 = vunpack.c.l.bf16 %v1655
    %v1665 = vrot.slane %v1638, 2
    %v1666 = vrot.slane %v1638, 4
    %v1667 = vrot.slane %v1638, 6
    %v1671 = vmul.f32 %v1656, %v1638
    %v1672 = vmul.f32 %v1657, %v1665
    %v1673 = vmul.f32 %v1658, %v1666
    %v1674 = vmul.f32 %v1659, %v1667
    %v1675 = vmul.f32 %v1660, %v1638
    %v1676 = vmul.f32 %v1661, %v1665
    %v1677 = vmul.f32 %v1662, %v1666
    %v1678 = vmul.f32 %v1663, %v1667
    %v1680 = vperm.slane %v1647, 0
    %v1682 = vrot.slane %v1680, 2
    %v1683 = vrot.slane %v1680, 4
    %v1684 = vrot.slane %v1680, 6
    %v1688 = vadd.f32 %v1671, %v1680
    %v1689 = vadd.f32 %v1672, %v1682
    %v1690 = vadd.f32 %v1673, %v1683
    %v1691 = vadd.f32 %v1674, %v1684
    %v1692 = vadd.f32 %v1675, %v1680
    %v1693 = vadd.f32 %v1676, %v1682
    %v1694 = vadd.f32 %v1677, %v1683
    %v1695 = vadd.f32 %v1678, %v1684
    %1704 = vst [vmem:[#allocation1] ss:$4 sm:$0xff] %v1688
    %s1705 = scalar_lea.vmem [#allocation1], 1
    %1706 = vst [vmem:[%s1705] ss:$4 sm:$0xff] %v1689
    %s1707 = scalar_lea.vmem [#allocation1], 2
    %1708 = vst [vmem:[%s1707] ss:$4 sm:$0xff] %v1690
    %s1709 = scalar_lea.vmem [#allocation1], 3
    %1710 = vst [vmem:[%s1709] ss:$4 sm:$0xff] %v1691
    %s1711 = scalar_lea.vmem [#allocation1], 32
    %1712 = vst [vmem:[%s1711] ss:$4 sm:$0xff] %v1692
    %s1713 = scalar_lea.vmem [#allocation1], 33
    %1714 = vst [vmem:[%s1713] ss:$4 sm:$0xff] %v1693
    %s1715 = scalar_lea.vmem [#allocation1], 34
    %1716 = vst [vmem:[%s1715] ss:$4 sm:$0xff] %v1694
    %s1717 = scalar_lea.vmem [#allocation1], 35
    %1718 = vst [vmem:[%s1717] ss:$4 sm:$0xff] %v1695
    %v1719 = vld.sshfl [vmem:[#allocation1] sm:$0xff pattern:$0x73625140]
    %v1720 = vld.sshfl [vmem:[#allocation1 + $0x20] sm:$0xff pattern:$0x73625140]
    %v1723 = vpack.c.bf16 %v1720, %v1719
    %v1724 = vld [vmem:[%s13] sm:$0xf]
    %v1725 = vld [vmem:[%s13 + $0x4] sm:$0xf]
    %v1726 = vld [vmem:[%s13 + $0x8] sm:$0xf]
    %v1727 = vld [vmem:[%s13 + $0xc] sm:$0xf]
    %v1728 = vld [vmem:[%s14] sm:$0x1]
    %v1730 = vperm.slane %v1728, 0
    %v1736 = vunpack.c.l.b16 %v1724
    %v1737 = vunpack.c.l.b16 %v1725
    %v1738 = vunpack.c.l.b16 %v1726
    %v1739 = vunpack.c.l.b16 %v1727
    %v1740 = vpack.c.b16 %v1737, %v1736
    %v1741 = vpack.c.b16 %v1739, %v1738
    %v1745 = vsel %vm343, %v1723, 0
    %1747 = vmatpush.bf16.msra.mxu0 0
    %1748 = vmatpush.bf16.msra.mxu0 0
    %1749 = vmatpush.bf16.msra.mxu0 0
    %1750 = vmatpush.bf16.msra.mxu0 0
    %1751 = vmatpush.bf16.msra.mxu0 0
    %1752 = vmatpush.bf16.msra.mxu0 0
    %1753 = vmatpush.bf16.msra.mxu0 %v1741
    %1754 = vmatpush.bf16.msra.mxu0 %v1740
    %1755 = vmatmul.bf16.gmra.mxu0 %v1745
    %v1756 = vpop.f32.mrf.mxu0
    %v1757 = vadd.f32 %v1730, %v1756
    %v1758 = vpop.f32.mrf.mxu0
    %v1759 = vadd.f32 %v1730, %v1758
    %1760 = vdwg.mxu0
    %1761 = vst [vmem:[#allocation1] ss:$4 sm:$0xff] %v56
    %s1762 = scalar_lea.vmem [#allocation1], 1
    %1763 = vst [vmem:[%s1762] ss:$4 sm:$0xff] %v57
    %s1764 = scalar_lea.vmem [#allocation1], 2
    %1765 = vst [vmem:[%s1764] ss:$4 sm:$0xff] %v58
    %s1766 = scalar_lea.vmem [#allocation1], 3
    %1767 = vst [vmem:[%s1766] ss:$4 sm:$0xff] %v59
    %s1768 = scalar_lea.vmem [#allocation1], 32
    %1769 = vst [vmem:[%s1768] ss:$4 sm:$0xff] %v60
    %s1770 = scalar_lea.vmem [#allocation1], 33
    %1771 = vst [vmem:[%s1770] ss:$4 sm:$0xff] %v61
    %s1772 = scalar_lea.vmem [#allocation1], 34
    %1773 = vst [vmem:[%s1772] ss:$4 sm:$0xff] %v62
    %s1774 = scalar_lea.vmem [#allocation1], 35
    %1775 = vst [vmem:[%s1774] ss:$4 sm:$0xff] %v63
    %v1776 = vld.sshfl [vmem:[#allocation1] sm:$0xff pattern:$0x73625140]
    %v1777 = vld.sshfl [vmem:[#allocation1 + $0x20] sm:$0xff pattern:$0x73625140]
    %v1780 = vadd.f32 %v1757, %v1776
    %v1781 = vadd.f32 %v1759, %v1777
    %v1784 = vrot.slane %v1780, 2
    %v1785 = vrot.slane %v1780, 4
    %v1786 = vrot.slane %v1780, 6
    %v1787 = vrot.slane %v1781, 2
    %v1788 = vrot.slane %v1781, 4
    %v1789 = vrot.slane %v1781, 6
    %vm1796 = vcmask 123904
    %1797 = vst.msk [vmem:[%s15] sm:$0x3] %vm1796, %v1780
    %1798 = vst.msk [vmem:[%s15 + $0x2] sm:$0x3] %vm1796, %v1784
    %1799 = vst.msk [vmem:[%s15 + $0x4] sm:$0x3] %vm1796, %v1785
    %1800 = vst.msk [vmem:[%s15 + $0x6] sm:$0x3] %vm1796, %v1786
    %1801 = vst.msk [vmem:[%s15 + $0x8] sm:$0x3] %vm1796, %v1781
    %1802 = vst.msk [vmem:[%s15 + $0xa] sm:$0x3] %vm1796, %v1787
    %1803 = vst.msk [vmem:[%s15 + $0xc] sm:$0x3] %vm1796, %v1788
    %1804 = vst.msk [vmem:[%s15 + $0xe] sm:$0x3] %vm1796, %v1789
    // Predicated region
    $region62: #{_rnn_forward_impl.1} parent=1 // pred_check
      _
    $region63: #{_rnn_forward_impl.1} parent=1 // pred_check_branch
      %1806 = sbr.rel (0) target = $region65
    $region64: #{_rnn_forward_impl.1} parent=1 // pred_region
      _
    $region65: #{_rnn_forward_impl.1} parent=1 // pred_fallthru
      _
    // Predicated region
    $region66: #{_rnn_forward_impl.1} parent=1 // pred_check
      _
    $region67: #{_rnn_forward_impl.1} parent=1 // pred_check_branch
      %1808 = sbr.rel (0) target = $region69
    $region68: #{_rnn_forward_impl.1} parent=1 // pred_region
      %1810 = vsyncadd [#allocation5], 0
      %s1811 = sshll.u32 [#allocation4], 4
      %s1812 = int_to_ptr.vmem [resolvable:$true] %s1811
      %s1813 = sshll.u32 %s16, 4
      %s1814 = int_to_ptr.hbm [resolvable:$true] %s1813
      %1819 = dma.vmem_to_hbm [thread:$0]  %s1812, 64, %s1814, [#allocation5], 32, 32, 2
    $region69: #{_rnn_forward_impl.1} parent=1 // pred_fallthru
      _
    // Predicated region
    $region70: #{_rnn_forward_impl.1} parent=1 // pred_check
      _
    $region71: #{_rnn_forward_impl.1} parent=1 // pred_check_branch
      %1821 = sbr.rel (0) target = $region73
    $region72: #{_rnn_forward_impl.1} parent=1 // pred_region
      %1823 = vsyncadd [#allocation7], 0
      %s1824 = sshll.u32 [#allocation6], 4
      %s1825 = int_to_ptr.vmem [resolvable:$true] %s1824
      %s1826 = sshll.u32 %s17, 4
      %s1827 = int_to_ptr.hbm [resolvable:$true] %s1826
      %1832 = dma.vmem_to_hbm [thread:$0]  %s1825, 64, %s1827, [#allocation7], 32, 32, 2
    $region73: #{_rnn_forward_impl.1} parent=1 // pred_fallthru
      _
    // Predicated region
    $region74: #{_rnn_forward_impl.1} parent=1 // pred_check
      _
    $region75: #{_rnn_forward_impl.1} parent=1 // pred_check_branch
      %1834 = sbr.rel (0) target = $region77
    $region76: #{_rnn_forward_impl.1} parent=1 // pred_region
      _
    $region77: #{_rnn_forward_impl.1} parent=1 // pred_fallthru
      _
    // Predicated region
    $region78: #{_rnn_forward_impl.1} parent=1 // pred_check
      _
    $region79: #{_rnn_forward_impl.1} parent=1 // pred_check_branch
      %1836 = sbr.rel (0) target = $region81
    $region80: #{_rnn_forward_impl.1} parent=1 // pred_region
      %1838 = dma.done [#allocation5], 64
    $region81: #{_rnn_forward_impl.1} parent=1 // pred_fallthru
      _
    // Predicated region
    $region82: #{_rnn_forward_impl.1} parent=1 // pred_check
      _
    $region83: #{_rnn_forward_impl.1} parent=1 // pred_check_branch
      %1840 = sbr.rel (0) target = $region85
    $region84: #{_rnn_forward_impl.1} parent=1 // pred_region
      %1842 = dma.done [#allocation7], 64
    $region85: #{_rnn_forward_impl.1} parent=1 // pred_fallthru
      _
    %1843 = vsyncpa [#allocation5], 1
    %1844 = vsyncpa [#allocation7], 1

</llo_original>
